<compile_context>
chip_gen: v7x
topology: tpu7x:2x2x1
jax: 0.10.0
libtpu: 0.0.40
codegen_flags: <defaults>
</compile_context>

<pallas_src>
import functools

import jax
import jax.numpy as jnp
from jax import lax
from jax.experimental import pallas as pl
from jax.experimental.pallas import tpu as pltpu


N_PAD = 128      # fc2 output padded to a full lane register (lane-dense store)
CONV_CH = 32     # all three convs have 32 output channels (as in the PyTorch Net)


def _conv_out(n):
    return (n - 3) // 2 + 1


def _pick_batch_tile(batch):
    """Batch rows per grid step (int8 input prefers >=32 sublanes when tiled)."""
    if batch <= 8:
        return batch
    for bt in (32, 16, 8):
        if batch % bt == 0:
            return bt
    return batch


# -----------------------------------------------------------------------------
# Fused whole-network kernel (one batch tile per grid step)
# -----------------------------------------------------------------------------
def _net_kernel(x_ref, w1_ref, b1_ref, w2_ref, b2_ref, w3_ref, b3_ref,
                wf1_ref, bf1_ref, wf2_ref, bf2_ref,
                o_ref,
                a0, a1, a2, a3, p1, p2, p3, f0,
                *, Bt, C1, Ho1, Wo1, Ho2, Wo2, Ho3, Wo3):
    # ---- ingest: int8 (bitcast of uint8 bytes) -> f32, u8 fix-up, /256 -------
    # One full-block VPU pass; activations are stored ONCE as bf16 so every
    # later copy / matmul works on half-width data (no per-dot casts).
    xi = x_ref[...].astype(jnp.float32)
    xi = jnp.where(xi < 0.0, xi + 256.0, xi) * (1.0 / 256.0)
    a0[...] = xi.astype(jnp.bfloat16)

    def conv(in_ref, p_ref, out_ref, w_ref, b_ref, Ci, Ho, Wo):
        # in_ref : (Hi, Bt, Wi*Ci) bf16 -- h on the leading axis, batch on
        #          sublanes, (w, c) interleaved on lanes so every 3-tap patch
        #          slab is one contiguous (Bt, 3*Ci) copy.
        # p_ref  : (Wo*Bt, 9*Ci)   bf16 -- patch matrix for ONE output row.
        # out_ref: (Ho, Bt, Wo*32) bf16 -- conv output already in the layout
        #          the next conv consumes (the old reorg pass is fused here).
        def row(y, carry):
            for x in range(Wo):
                for kh in range(3):                      # 3 taps, unrolled
                    p_ref[x * Bt:(x + 1) * Bt,
                          kh * 3 * Ci:(kh + 1) * 3 * Ci] = (
                        in_ref[2 * y + kh, :,
                               2 * x * Ci: 2 * x * Ci + 3 * Ci])
            acc = jnp.dot(p_ref[...], w_ref[...],
                          preferred_element_type=jnp.float32)
            acc = jnp.maximum(acc + b_ref[...], 0.0).astype(jnp.bfloat16)
            # Fused "reorg": scatter the (x, b) result rows straight into the
            # (y, b, x*32) activation layout -- no intermediate conv buffer.
            for x in range(Wo):
                out_ref[y, :, x * CONV_CH:(x + 1) * CONV_CH] = (
                    acc[x * Bt:(x + 1) * Bt, :])
            return carry
        lax.fori_loop(0, Ho, row, 0)

    # ---- conv stack (3x conv3x3 stride2 + ReLU), entirely in VMEM ------------
    conv(a0, p1, a1, w1_ref, b1_ref, C1, Ho1, Wo1)
    conv(a1, p2, a2, w2_ref, b2_ref, CONV_CH, Ho2, Wo2)
    conv(a2, p3, a3, w3_ref, b3_ref, CONV_CH, Ho3, Wo3)

    # ---- flatten to (Bt, Ho3*Wo3*32): one wide (Bt, Wo3*32) slab per row; the
    #      (y, x, c) order is absorbed into the offline fc1 row permutation ----
    for y in range(Ho3):
        f0[:, y * Wo3 * CONV_CH:(y + 1) * Wo3 * CONV_CH] = a3[y, :, :]

    # ---- fc1 + ReLU (bf16 operands, f32 accumulate) ---------------------------
    h = jnp.dot(f0[...], wf1_ref[...], preferred_element_type=jnp.float32)
    h = jnp.maximum(h + bf1_ref[...], 0.0)

    # ---- fc2 (padded to 128 lanes, pad cols carry -1e30 f32 bias) + softmax ---
    logits = jnp.dot(h.astype(jnp.bfloat16), wf2_ref[...],
                     preferred_element_type=jnp.float32) + bf2_ref[...]
    logits = logits - jnp.max(logits, axis=-1, keepdims=True)
    e = jnp.exp(logits)
    den = jnp.sum(e, axis=-1, keepdims=True)
    inv = pl.reciprocal(den, approx=True)            # EUP slot (nearly free)
    inv = inv * (2.0 - den * inv)                    # one Newton step -> ~f32 exact
    o_ref[...] = e * inv


# -----------------------------------------------------------------------------
# VMEM budgeting helper (padded to native tiles, per-generation safe cap)
# -----------------------------------------------------------------------------
def _vmem_bytes(shape, dtype):
    item = jnp.dtype(dtype).itemsize
    sub = {1: 32, 2: 16, 4: 8}.get(item, 8)
    s = (1, 1) + tuple(int(d) for d in shape)
    lead = 1
    for d in s[:-2]:
        lead *= d
    rows = -(-s[-2] // sub) * sub
    cols = -(-s[-1] // 128) * 128
    return lead * rows * cols * item


# -----------------------------------------------------------------------------
# Forward wrapper (single pallas_call, batch grid)
# -----------------------------------------------------------------------------
def _net_forward(kp, x_u8, *, n_actions):
    B, C, H, W = x_u8.shape
    Ho1, Wo1 = _conv_out(H), _conv_out(W)
    Ho2, Wo2 = _conv_out(Ho1), _conv_out(Wo1)
    Ho3, Wo3 = _conv_out(Ho2), _conv_out(Wo2)
    Bt = _pick_batch_tile(B)
    assert B % Bt == 0

    # NCHW uint8 -> (H, B, W*C) int8: same bytes (bitcast), h-major so every
    # in-kernel patch slab is a contiguous copy.  This is byte-sized HBM
    # traffic only; the f32 cast, u8 fix-up and /256 happen on the VPU inside
    # the kernel.
    # TODO(synk): fold this transpose into the input index_map if BlockSpec
    # ever supports permuted element mappings (cost here is ~B*C*H*W bytes).
    x3d = jnp.transpose(x_u8, (2, 0, 3, 1)).reshape(H, B, W * C)
    x_i8 = jax.lax.bitcast_convert_type(x3d, jnp.int8)

    kern = functools.partial(_net_kernel, Bt=Bt, C1=C, Ho1=Ho1, Wo1=Wo1,
                             Ho2=Ho2, Wo2=Wo2, Ho3=Ho3, Wo3=Wo3)

    bf16 = jnp.bfloat16
    scratch_defs = [
        ((H, Bt, W * C), bf16),               # a0: scaled input
        ((Ho1, Bt, Wo1 * CONV_CH), bf16),     # a1: conv1 out / conv2 in
        ((Ho2, Bt, Wo2 * CONV_CH), bf16),     # a2: conv2 out / conv3 in
        ((Ho3, Bt, Wo3 * CONV_CH), bf16),     # a3: conv3 out
        ((Wo1 * Bt, 9 * C), bf16),            # p1: one-row patch matrix
        ((Wo2 * Bt, 9 * CONV_CH), bf16),      # p2
        ((Wo3 * Bt, 9 * CONV_CH), bf16),      # p3
        ((Bt, Ho3 * Wo3 * CONV_CH), bf16),    # f0: fc input
    ]
    scratch = [pltpu.VMEM(s, d) for s, d in scratch_defs]

    # Re-derive the VMEM budget from the actual tile sizes (double-buffered
    # input/output blocks + resident weights + scratch), capped at 48 MiB so
    # the kernel also fits v7x's 64 MiB physical VMEM (v5e/v6e have 128 MiB).
    est = sum(_vmem_bytes(s, d) for s, d in scratch_defs)
    est += 2 * _vmem_bytes((H, Bt, W * C), jnp.int8)          # pipelined input
    est += 2 * _vmem_bytes((Bt, N_PAD), jnp.float32)          # pipelined output
    est += sum(_vmem_bytes(v.shape, v.dtype) for v in kp.values())
    vmem_limit = int(min(max(2 * est, 32 * 1024 * 1024), 48 * 1024 * 1024))

    vmem = pl.BlockSpec(memory_space=pltpu.MemorySpace.VMEM)   # weights: untiled,
    out = pl.pallas_call(                                      # VMEM-resident
        kern,
        out_shape=jax.ShapeDtypeStruct((B, N_PAD), jnp.float32),
        grid=(B // Bt,),
        in_specs=[pl.BlockSpec((H, Bt, W * C), lambda i: (0, i, 0))] + [vmem] * 10,
        out_specs=pl.BlockSpec((Bt, N_PAD), lambda i: (i, 0)),
        scratch_shapes=scratch,
        compiler_params=pltpu.CompilerParams(
            dimension_semantics=("parallel",),
            vmem_limit_bytes=vmem_limit),
    )(x_i8, kp["w1"], kp["b1"], kp["w2"], kp["b2"], kp["w3"], kp["b3"],
      kp["wf1"], kp["bf1"], kp["wf2"], kp["bf2"])
    return out[:, :n_actions]


net_forward = jax.jit(_net_forward, static_argnames=("n_actions",))


# -----------------------------------------------------------------------------
# Parameters: PyTorch-layout init + one-time reorder into the kernel layout
# -----------------------------------------------------------------------------
def init_params(key, in_channels, hw, n_actions):
    oh = hw
    for _ in range(3):
        oh = _conv_out(oh)
    conv_out_size = CONV_CH * oh * oh
    keys = jax.random.split(key, 10)

    def u(k, shape, fan_in):
        bound = 1.0 / jnp.sqrt(jnp.float32(fan_in))
        return jax.random.uniform(k, shape, jnp.float32, -bound, bound)

    return {
        "conv1_w": u(keys[0], (CONV_CH, in_channels, 3, 3), in_channels * 9),
        "conv1_b": u(keys[1], (CONV_CH,), in_channels * 9),
        "conv2_w": u(keys[2], (CONV_CH, CONV_CH, 3, 3), CONV_CH * 9),
        "conv2_b": u(keys[3], (CONV_CH,), CONV_CH * 9),
        "conv3_w": u(keys[4], (CONV_CH, CONV_CH, 3, 3), CONV_CH * 9),
        "conv3_b": u(keys[5], (CONV_CH,), CONV_CH * 9),
        "fc1_w": u(keys[6], (conv_out_size, 256), conv_out_size),  # rows in NCHW (c,y,x) order
        "fc1_b": u(keys[7], (256,), conv_out_size),
        "fc2_w": u(keys[8], (256, n_actions), 256),
        "fc2_b": u(keys[9], (n_actions,), 256),
    }


def prepare_params(params, input_shape, n_actions):
    """One-time reorder of PyTorch-layout params into the kernel's matmul layout."""
    C, H, W = input_shape
    Ho3 = _conv_out(_conv_out(_conv_out(H)))
    Wo3 = _conv_out(_conv_out(_conv_out(W)))
    conv_out_size = CONV_CH * Ho3 * Wo3

    def conv_w(w):   # (Co, Ci, 3, 3) -> rows (kh, kw, ci) x cols (co), bf16 for MXU
        return jnp.transpose(w, (2, 3, 1, 0)).reshape(-1, w.shape[0]).astype(jnp.bfloat16)

    # fc1 rows are ordered (c, y, x) by PyTorch's NCHW flatten; the kernel
    # flattens (y, x, c) -> permute the rows offline (zero runtime cost).
    perm = jnp.transpose(
        jnp.arange(conv_out_size).reshape(CONV_CH, Ho3, Wo3), (1, 2, 0)).reshape(-1)
    wf1 = params["fc1_w"][perm].astype(jnp.bfloat16)

    # fc2 padded to 128 lanes: zero weights and -1e30 f32 bias on pad columns,
    # so the in-kernel softmax gives them exactly zero probability.
    wf2 = jnp.zeros((256, N_PAD), jnp.bfloat16)
    wf2 = wf2.at[:, :n_actions].set(params["fc2_w"].astype(jnp.bfloat16))
    bf2 = jnp.full((1, N_PAD), -1e30, jnp.float32)
    bf2 = bf2.at[0, :n_actions].set(params["fc2_b"])

    return {
        "w1": conv_w(params["conv1_w"]), "b1": params["conv1_b"].reshape(1, -1),
        "w2": conv_w(params["conv2_w"]), "b2": params["conv2_b"].reshape(1, -1),
        "w3": conv_w(params["conv3_w"]), "b3": params["conv3_b"].reshape(1, -1),
        "wf1": wf1, "bf1": params["fc1_b"].reshape(1, -1),
        "wf2": wf2, "bf2": bf2,
    }


# -----------------------------------------------------------------------------
# Pure-JAX reference (f32) for correctness checking
# -----------------------------------------------------------------------------
def _reference_forward(params, x_u8):
    x = x_u8.astype(jnp.float32) / 256.0

    def conv(v, w, b):
        y = jax.lax.conv_general_dilated(
            v, w, window_strides=(2, 2), padding="VALID",
            dimension_numbers=("NCHW", "OIHW", "NCHW"))
        return jnp.maximum(y + b[None, :, None, None], 0.0)

    v = conv(x, params["conv1_w"], params["conv1_b"])
    v = conv(v, params["conv2_w"], params["conv2_b"])
    v = conv(v, params["conv3_w"], params["conv3_b"])
    f = v.reshape(v.shape[0], -1)
    h = jnp.maximum(f @ params["fc1_w"] + params["fc1_b"], 0.0)
    logits = h @ params["fc2_w"] + params["fc2_b"]
    return jax.nn.softmax(logits, axis=-1)


if __name__ == "__main__":
    B, C, HW, N_ACTIONS = 2, 4, 16, 4          # input_shape = (4, 16, 16)
    key = jax.random.PRNGKey(0)
    k_params, k_x = jax.random.split(key)
    params = init_params(k_params, C, HW, N_ACTIONS)
    kparams = prepare_params(params, (C, HW, HW), N_ACTIONS)

    # Atari-style byte observations (NCHW uint8, exactly what the PyTorch net eats).
    x = jax.random.randint(k_x, (B, C, HW, HW), 0, 256, dtype=jnp.int32).astype(jnp.uint8)

    probs = net_forward(kparams, x, n_actions=N_ACTIONS)
    jax.block_until_ready(probs)

    ref = _reference_forward(params, x)
    assert probs.shape == (B, N_ACTIONS)
    assert bool(jnp.all(jnp.isfinite(probs)))
    assert bool(jnp.allclose(jnp.sum(probs, axis=-1), 1.0, atol=1e-5))
    # bf16 MXU operands -> small deviation from the f32 reference is expected.
    assert bool(jnp.allclose(probs, ref, atol=2e-2)), float(jnp.max(jnp.abs(probs - ref)))
    print("KERNEL_OK")
</pallas_src>

<mosaic_0001>
module attributes {stable_mosaic.version = 11 : i64} {
  func.func @_net_kernel(%arg0: i32, %arg1: memref<16x2x64xi8, #tpu.memory_space<vmem>>, %arg2: memref<36x32xbf16, #tpu.memory_space<vmem>>, %arg3: memref<1x32xf32, #tpu.memory_space<vmem>>, %arg4: memref<288x32xbf16, #tpu.memory_space<vmem>>, %arg5: memref<1x32xf32, #tpu.memory_space<vmem>>, %arg6: memref<288x32xbf16, #tpu.memory_space<vmem>>, %arg7: memref<1x32xf32, #tpu.memory_space<vmem>>, %arg8: memref<32x256xbf16, #tpu.memory_space<vmem>>, %arg9: memref<1x256xf32, #tpu.memory_space<vmem>>, %arg10: memref<256x128xbf16, #tpu.memory_space<vmem>>, %arg11: memref<1x128xf32, #tpu.memory_space<vmem>>, %arg12: memref<2x128xf32, #tpu.memory_space<vmem>>, %arg13: memref<16x2x64xbf16, #tpu.memory_space<vmem>>, %arg14: memref<7x2x224xbf16, #tpu.memory_space<vmem>>, %arg15: memref<3x2x96xbf16, #tpu.memory_space<vmem>>, %arg16: memref<1x2x32xbf16, #tpu.memory_space<vmem>>, %arg17: memref<14x36xbf16, #tpu.memory_space<vmem>>, %arg18: memref<6x288xbf16, #tpu.memory_space<vmem>>, %arg19: memref<2x288xbf16, #tpu.memory_space<vmem>>, %arg20: memref<2x32xbf16, #tpu.memory_space<vmem>>) attributes {dimension_semantics = [#tpu.dimension_semantics<parallel>], iteration_bounds = array<i64: 1>, scalar_prefetch = 0 : i64, scratch_operands = 8 : i64, tpu.core_type = #tpu.core_type<tc>, window_params = [{transform_indices = @transform_0, window_bounds = array<i64: 16, 2, 64>}, {pipeline_mode = #tpu.pipeline_mode<synchronous>, transform_indices = @transform_1, window_bounds = array<i64: 36, 32>}, {pipeline_mode = #tpu.pipeline_mode<synchronous>, transform_indices = @transform_2, window_bounds = array<i64: 1, 32>}, {pipeline_mode = #tpu.pipeline_mode<synchronous>, transform_indices = @transform_3, window_bounds = array<i64: 288, 32>}, {pipeline_mode = #tpu.pipeline_mode<synchronous>, transform_indices = @transform_4, window_bounds = array<i64: 1, 32>}, {pipeline_mode = #tpu.pipeline_mode<synchronous>, transform_indices = @transform_5, window_bounds = array<i64: 288, 32>}, {pipeline_mode = #tpu.pipeline_mode<synchronous>, transform_indices = @transform_6, window_bounds = array<i64: 1, 32>}, {pipeline_mode = #tpu.pipeline_mode<synchronous>, transform_indices = @transform_7, window_bounds = array<i64: 32, 256>}, {pipeline_mode = #tpu.pipeline_mode<synchronous>, transform_indices = @transform_8, window_bounds = array<i64: 1, 256>}, {pipeline_mode = #tpu.pipeline_mode<synchronous>, transform_indices = @transform_9, window_bounds = array<i64: 256, 128>}, {pipeline_mode = #tpu.pipeline_mode<synchronous>, transform_indices = @transform_10, window_bounds = array<i64: 1, 128>}, {transform_indices = @transform_11, window_bounds = array<i64: 2, 128>}]} {
    %c0 = arith.constant 0 : index
    %c0_0 = arith.constant 0 : index
    %c0_1 = arith.constant 0 : index
    %0 = vector.load %arg1[%c0, %c0_0, %c0_1] : memref<16x2x64xi8, #tpu.memory_space<vmem>>, vector<16x2x64xi8>
    %1 = arith.sitofp %0 : vector<16x2x64xi8> to vector<16x2x64xf32>
    %cst = arith.constant 0.000000e+00 : f32
    %2 = vector.broadcast %cst : f32 to vector<16x2x64xf32>
    %3 = arith.cmpf olt, %1, %2 : vector<16x2x64xf32>
    %cst_2 = arith.constant 2.560000e+02 : f32
    %4 = vector.broadcast %cst_2 : f32 to vector<16x2x64xf32>
    %5 = arith.addf %1, %4 : vector<16x2x64xf32>
    %6 = arith.select %3, %5, %1 : vector<16x2x64xi1>, vector<16x2x64xf32>
    %cst_3 = arith.constant 3.906250e-03 : f32
    %7 = vector.broadcast %cst_3 : f32 to vector<16x2x64xf32>
    %8 = arith.mulf %6, %7 : vector<16x2x64xf32>
    %9 = arith.truncf %8 : vector<16x2x64xf32> to vector<16x2x64xbf16>
    %c0_4 = arith.constant 0 : index
    %c0_5 = arith.constant 0 : index
    %c0_6 = arith.constant 0 : index
    %10 = vector.load %arg13[%c0_4, %c0_5, %c0_6] : memref<16x2x64xbf16, #tpu.memory_space<vmem>>, vector<16x2x64xbf16>
    tpu.vector_store %arg13[%c0_4, %c0_5, %c0_6], %9 {strides = array<i32>} : memref<16x2x64xbf16, #tpu.memory_space<vmem>>, vector<16x2x64xbf16>,
    %c0_i32 = arith.constant 0 : i32
    %c7_i32 = arith.constant 7 : i32
    %11 = arith.addi %c0_i32, %c7_i32 : i32
    %c1_i32 = arith.constant 1 : i32
    scf.for %arg21 = %c0_i32 to %11 step %c1_i32  : i32 {
      %c2_i32_61 = arith.constant 2 : i32
      %76 = arith.muli %c2_i32_61, %arg21 : i32
      %c0_i32_62 = arith.constant 0 : i32
      %77 = arith.addi %76, %c0_i32_62 : i32
      %78 = arith.index_cast %77 : i32 to index
      %c0_63 = arith.constant 0 : index
      %c0_64 = arith.constant 0 : index
      %79 = vector.load %arg13[%78, %c0_63, %c0_64] : memref<16x2x64xbf16, #tpu.memory_space<vmem>>, vector<1x2x12xbf16>
      %80 = vector.shape_cast %79 : vector<1x2x12xbf16> to vector<2x12xbf16>
      %c0_65 = arith.constant 0 : index
      %c0_66 = arith.constant 0 : index
      %81 = vector.load %arg17[%c0_65, %c0_66] : memref<14x36xbf16, #tpu.memory_space<vmem>>, vector<2x12xbf16>
      tpu.vector_store %arg17[%c0_65, %c0_66], %80 {strides = array<i32>} : memref<14x36xbf16, #tpu.memory_space<vmem>>, vector<2x12xbf16>,
      %c2_i32_67 = arith.constant 2 : i32
      %82 = arith.muli %c2_i32_67, %arg21 : i32
      %c1_i32_68 = arith.constant 1 : i32
      %83 = arith.addi %82, %c1_i32_68 : i32
      %84 = arith.index_cast %83 : i32 to index
      %c0_69 = arith.constant 0 : index
      %c0_70 = arith.constant 0 : index
      %85 = vector.load %arg13[%84, %c0_69, %c0_70] : memref<16x2x64xbf16, #tpu.memory_space<vmem>>, vector<1x2x12xbf16>
      %86 = vector.shape_cast %85 : vector<1x2x12xbf16> to vector<2x12xbf16>
      %c0_71 = arith.constant 0 : index
      %c12 = arith.constant 12 : index
      %87 = vector.load %arg17[%c0_71, %c12] : memref<14x36xbf16, #tpu.memory_space<vmem>>, vector<2x12xbf16>
      tpu.vector_store %arg17[%c0_71, %c12], %86 {strides = array<i32>} : memref<14x36xbf16, #tpu.memory_space<vmem>>, vector<2x12xbf16>,
      %c2_i32_72 = arith.constant 2 : i32
      %88 = arith.muli %c2_i32_72, %arg21 : i32
      %c2_i32_73 = arith.constant 2 : i32
      %89 = arith.addi %88, %c2_i32_73 : i32
      %90 = arith.index_cast %89 : i32 to index
      %c0_74 = arith.constant 0 : index
      %c0_75 = arith.constant 0 : index
      %91 = vector.load %arg13[%90, %c0_74, %c0_75] : memref<16x2x64xbf16, #tpu.memory_space<vmem>>, vector<1x2x12xbf16>
      %92 = vector.shape_cast %91 : vector<1x2x12xbf16> to vector<2x12xbf16>
      %c0_76 = arith.constant 0 : index
      %c24 = arith.constant 24 : index
      %93 = vector.load %arg17[%c0_76, %c24] : memref<14x36xbf16, #tpu.memory_space<vmem>>, vector<2x12xbf16>
      tpu.vector_store %arg17[%c0_76, %c24], %92 {strides = array<i32>} : memref<14x36xbf16, #tpu.memory_space<vmem>>, vector<2x12xbf16>,
      %c2_i32_77 = arith.constant 2 : i32
      %94 = arith.muli %c2_i32_77, %arg21 : i32
      %c0_i32_78 = arith.constant 0 : i32
      %95 = arith.addi %94, %c0_i32_78 : i32
      %96 = arith.index_cast %95 : i32 to index
      %c0_79 = arith.constant 0 : index
      %c8 = arith.constant 8 : index
      %97 = vector.load %arg13[%96, %c0_79, %c8] : memref<16x2x64xbf16, #tpu.memory_space<vmem>>, vector<1x2x12xbf16>
      %98 = vector.shape_cast %97 : vector<1x2x12xbf16> to vector<2x12xbf16>
      %c2 = arith.constant 2 : index
      %c0_80 = arith.constant 0 : index
      %99 = vector.load %arg17[%c2, %c0_80] : memref<14x36xbf16, #tpu.memory_space<vmem>>, vector<2x12xbf16>
      tpu.vector_store %arg17[%c2, %c0_80], %98 {strides = array<i32>} : memref<14x36xbf16, #tpu.memory_space<vmem>>, vector<2x12xbf16>,
      %c2_i32_81 = arith.constant 2 : i32
      %100 = arith.muli %c2_i32_81, %arg21 : i32
      %c1_i32_82 = arith.constant 1 : i32
      %101 = arith.addi %100, %c1_i32_82 : i32
      %102 = arith.index_cast %101 : i32 to index
      %c0_83 = arith.constant 0 : index
      %c8_84 = arith.constant 8 : index
      %103 = vector.load %arg13[%102, %c0_83, %c8_84] : memref<16x2x64xbf16, #tpu.memory_space<vmem>>, vector<1x2x12xbf16>
      %104 = vector.shape_cast %103 : vector<1x2x12xbf16> to vector<2x12xbf16>
      %c2_85 = arith.constant 2 : index
      %c12_86 = arith.constant 12 : index
      %105 = vector.load %arg17[%c2_85, %c12_86] : memref<14x36xbf16, #tpu.memory_space<vmem>>, vector<2x12xbf16>
      tpu.vector_store %arg17[%c2_85, %c12_86], %104 {strides = array<i32>} : memref<14x36xbf16, #tpu.memory_space<vmem>>, vector<2x12xbf16>,
      %c2_i32_87 = arith.constant 2 : i32
      %106 = arith.muli %c2_i32_87, %arg21 : i32
      %c2_i32_88 = arith.constant 2 : i32
      %107 = arith.addi %106, %c2_i32_88 : i32
      %108 = arith.index_cast %107 : i32 to index
      %c0_89 = arith.constant 0 : index
      %c8_90 = arith.constant 8 : index
      %109 = vector.load %arg13[%108, %c0_89, %c8_90] : memref<16x2x64xbf16, #tpu.memory_space<vmem>>, vector<1x2x12xbf16>
      %110 = vector.shape_cast %109 : vector<1x2x12xbf16> to vector<2x12xbf16>
      %c2_91 = arith.constant 2 : index
      %c24_92 = arith.constant 24 : index
      %111 = vector.load %arg17[%c2_91, %c24_92] : memref<14x36xbf16, #tpu.memory_space<vmem>>, vector<2x12xbf16>
      tpu.vector_store %arg17[%c2_91, %c24_92], %110 {strides = array<i32>} : memref<14x36xbf16, #tpu.memory_space<vmem>>, vector<2x12xbf16>,
      %c2_i32_93 = arith.constant 2 : i32
      %112 = arith.muli %c2_i32_93, %arg21 : i32
      %c0_i32_94 = arith.constant 0 : i32
      %113 = arith.addi %112, %c0_i32_94 : i32
      %114 = arith.index_cast %113 : i32 to index
      %c0_95 = arith.constant 0 : index
      %c16 = arith.constant 16 : index
      %115 = vector.load %arg13[%114, %c0_95, %c16] : memref<16x2x64xbf16, #tpu.memory_space<vmem>>, vector<1x2x12xbf16>
      %116 = vector.shape_cast %115 : vector<1x2x12xbf16> to vector<2x12xbf16>
      %c4 = arith.constant 4 : index
      %c0_96 = arith.constant 0 : index
      %117 = vector.load %arg17[%c4, %c0_96] : memref<14x36xbf16, #tpu.memory_space<vmem>>, vector<2x12xbf16>
      tpu.vector_store %arg17[%c4, %c0_96], %116 {strides = array<i32>} : memref<14x36xbf16, #tpu.memory_space<vmem>>, vector<2x12xbf16>,
      %c2_i32_97 = arith.constant 2 : i32
      %118 = arith.muli %c2_i32_97, %arg21 : i32
      %c1_i32_98 = arith.constant 1 : i32
      %119 = arith.addi %118, %c1_i32_98 : i32
      %120 = arith.index_cast %119 : i32 to index
      %c0_99 = arith.constant 0 : index
      %c16_100 = arith.constant 16 : index
      %121 = vector.load %arg13[%120, %c0_99, %c16_100] : memref<16x2x64xbf16, #tpu.memory_space<vmem>>, vector<1x2x12xbf16>
      %122 = vector.shape_cast %121 : vector<1x2x12xbf16> to vector<2x12xbf16>
      %c4_101 = arith.constant 4 : index
      %c12_102 = arith.constant 12 : index
      %123 = vector.load %arg17[%c4_101, %c12_102] : memref<14x36xbf16, #tpu.memory_space<vmem>>, vector<2x12xbf16>
      tpu.vector_store %arg17[%c4_101, %c12_102], %122 {strides = array<i32>} : memref<14x36xbf16, #tpu.memory_space<vmem>>, vector<2x12xbf16>,
      %c2_i32_103 = arith.constant 2 : i32
      %124 = arith.muli %c2_i32_103, %arg21 : i32
      %c2_i32_104 = arith.constant 2 : i32
      %125 = arith.addi %124, %c2_i32_104 : i32
      %126 = arith.index_cast %125 : i32 to index
      %c0_105 = arith.constant 0 : index
      %c16_106 = arith.constant 16 : index
      %127 = vector.load %arg13[%126, %c0_105, %c16_106] : memref<16x2x64xbf16, #tpu.memory_space<vmem>>, vector<1x2x12xbf16>
      %128 = vector.shape_cast %127 : vector<1x2x12xbf16> to vector<2x12xbf16>
      %c4_107 = arith.constant 4 : index
      %c24_108 = arith.constant 24 : index
      %129 = vector.load %arg17[%c4_107, %c24_108] : memref<14x36xbf16, #tpu.memory_space<vmem>>, vector<2x12xbf16>
      tpu.vector_store %arg17[%c4_107, %c24_108], %128 {strides = array<i32>} : memref<14x36xbf16, #tpu.memory_space<vmem>>, vector<2x12xbf16>,
      %c2_i32_109 = arith.constant 2 : i32
      %130 = arith.muli %c2_i32_109, %arg21 : i32
      %c0_i32_110 = arith.constant 0 : i32
      %131 = arith.addi %130, %c0_i32_110 : i32
      %132 = arith.index_cast %131 : i32 to index
      %c0_111 = arith.constant 0 : index
      %c24_112 = arith.constant 24 : index
      %133 = vector.load %arg13[%132, %c0_111, %c24_112] : memref<16x2x64xbf16, #tpu.memory_space<vmem>>, vector<1x2x12xbf16>
      %134 = vector.shape_cast %133 : vector<1x2x12xbf16> to vector<2x12xbf16>
      %c6 = arith.constant 6 : index
      %c0_113 = arith.constant 0 : index
      %135 = vector.load %arg17[%c6, %c0_113] : memref<14x36xbf16, #tpu.memory_space<vmem>>, vector<2x12xbf16>
      tpu.vector_store %arg17[%c6, %c0_113], %134 {strides = array<i32>} : memref<14x36xbf16, #tpu.memory_space<vmem>>, vector<2x12xbf16>,
      %c2_i32_114 = arith.constant 2 : i32
      %136 = arith.muli %c2_i32_114, %arg21 : i32
      %c1_i32_115 = arith.constant 1 : i32
      %137 = arith.addi %136, %c1_i32_115 : i32
      %138 = arith.index_cast %137 : i32 to index
      %c0_116 = arith.constant 0 : index
      %c24_117 = arith.constant 24 : index
      %139 = vector.load %arg13[%138, %c0_116, %c24_117] : memref<16x2x64xbf16, #tpu.memory_space<vmem>>, vector<1x2x12xbf16>
      %140 = vector.shape_cast %139 : vector<1x2x12xbf16> to vector<2x12xbf16>
      %c6_118 = arith.constant 6 : index
      %c12_119 = arith.constant 12 : index
      %141 = vector.load %arg17[%c6_118, %c12_119] : memref<14x36xbf16, #tpu.memory_space<vmem>>, vector<2x12xbf16>
      tpu.vector_store %arg17[%c6_118, %c12_119], %140 {strides = array<i32>} : memref<14x36xbf16, #tpu.memory_space<vmem>>, vector<2x12xbf16>,
      %c2_i32_120 = arith.constant 2 : i32
      %142 = arith.muli %c2_i32_120, %arg21 : i32
      %c2_i32_121 = arith.constant 2 : i32
      %143 = arith.addi %142, %c2_i32_121 : i32
      %144 = arith.index_cast %143 : i32 to index
      %c0_122 = arith.constant 0 : index
      %c24_123 = arith.constant 24 : index
      %145 = vector.load %arg13[%144, %c0_122, %c24_123] : memref<16x2x64xbf16, #tpu.memory_space<vmem>>, vector<1x2x12xbf16>
      %146 = vector.shape_cast %145 : vector<1x2x12xbf16> to vector<2x12xbf16>
      %c6_124 = arith.constant 6 : index
      %c24_125 = arith.constant 24 : index
      %147 = vector.load %arg17[%c6_124, %c24_125] : memref<14x36xbf16, #tpu.memory_space<vmem>>, vector<2x12xbf16>
      tpu.vector_store %arg17[%c6_124, %c24_125], %146 {strides = array<i32>} : memref<14x36xbf16, #tpu.memory_space<vmem>>, vector<2x12xbf16>,
      %c2_i32_126 = arith.constant 2 : i32
      %148 = arith.muli %c2_i32_126, %arg21 : i32
      %c0_i32_127 = arith.constant 0 : i32
      %149 = arith.addi %148, %c0_i32_127 : i32
      %150 = arith.index_cast %149 : i32 to index
      %c0_128 = arith.constant 0 : index
      %c32 = arith.constant 32 : index
      %151 = vector.load %arg13[%150, %c0_128, %c32] : memref<16x2x64xbf16, #tpu.memory_space<vmem>>, vector<1x2x12xbf16>
      %152 = vector.shape_cast %151 : vector<1x2x12xbf16> to vector<2x12xbf16>
      %c8_129 = arith.constant 8 : index
      %c0_130 = arith.constant 0 : index
      %153 = vector.load %arg17[%c8_129, %c0_130] : memref<14x36xbf16, #tpu.memory_space<vmem>>, vector<2x12xbf16>
      tpu.vector_store %arg17[%c8_129, %c0_130], %152 {strides = array<i32>} : memref<14x36xbf16, #tpu.memory_space<vmem>>, vector<2x12xbf16>,
      %c2_i32_131 = arith.constant 2 : i32
      %154 = arith.muli %c2_i32_131, %arg21 : i32
      %c1_i32_132 = arith.constant 1 : i32
      %155 = arith.addi %154, %c1_i32_132 : i32
      %156 = arith.index_cast %155 : i32 to index
      %c0_133 = arith.constant 0 : index
      %c32_134 = arith.constant 32 : index
      %157 = vector.load %arg13[%156, %c0_133, %c32_134] : memref<16x2x64xbf16, #tpu.memory_space<vmem>>, vector<1x2x12xbf16>
      %158 = vector.shape_cast %157 : vector<1x2x12xbf16> to vector<2x12xbf16>
      %c8_135 = arith.constant 8 : index
      %c12_136 = arith.constant 12 : index
      %159 = vector.load %arg17[%c8_135, %c12_136] : memref<14x36xbf16, #tpu.memory_space<vmem>>, vector<2x12xbf16>
      tpu.vector_store %arg17[%c8_135, %c12_136], %158 {strides = array<i32>} : memref<14x36xbf16, #tpu.memory_space<vmem>>, vector<2x12xbf16>,
      %c2_i32_137 = arith.constant 2 : i32
      %160 = arith.muli %c2_i32_137, %arg21 : i32
      %c2_i32_138 = arith.constant 2 : i32
      %161 = arith.addi %160, %c2_i32_138 : i32
      %162 = arith.index_cast %161 : i32 to index
      %c0_139 = arith.constant 0 : index
      %c32_140 = arith.constant 32 : index
      %163 = vector.load %arg13[%162, %c0_139, %c32_140] : memref<16x2x64xbf16, #tpu.memory_space<vmem>>, vector<1x2x12xbf16>
      %164 = vector.shape_cast %163 : vector<1x2x12xbf16> to vector<2x12xbf16>
      %c8_141 = arith.constant 8 : index
      %c24_142 = arith.constant 24 : index
      %165 = vector.load %arg17[%c8_141, %c24_142] : memref<14x36xbf16, #tpu.memory_space<vmem>>, vector<2x12xbf16>
      tpu.vector_store %arg17[%c8_141, %c24_142], %164 {strides = array<i32>} : memref<14x36xbf16, #tpu.memory_space<vmem>>, vector<2x12xbf16>,
      %c2_i32_143 = arith.constant 2 : i32
      %166 = arith.muli %c2_i32_143, %arg21 : i32
      %c0_i32_144 = arith.constant 0 : i32
      %167 = arith.addi %166, %c0_i32_144 : i32
      %168 = arith.index_cast %167 : i32 to index
      %c0_145 = arith.constant 0 : index
      %c40 = arith.constant 40 : index
      %169 = vector.load %arg13[%168, %c0_145, %c40] : memref<16x2x64xbf16, #tpu.memory_space<vmem>>, vector<1x2x12xbf16>
      %170 = vector.shape_cast %169 : vector<1x2x12xbf16> to vector<2x12xbf16>
      %c10 = arith.constant 10 : index
      %c0_146 = arith.constant 0 : index
      %171 = vector.load %arg17[%c10, %c0_146] : memref<14x36xbf16, #tpu.memory_space<vmem>>, vector<2x12xbf16>
      tpu.vector_store %arg17[%c10, %c0_146], %170 {strides = array<i32>} : memref<14x36xbf16, #tpu.memory_space<vmem>>, vector<2x12xbf16>,
      %c2_i32_147 = arith.constant 2 : i32
      %172 = arith.muli %c2_i32_147, %arg21 : i32
      %c1_i32_148 = arith.constant 1 : i32
      %173 = arith.addi %172, %c1_i32_148 : i32
      %174 = arith.index_cast %173 : i32 to index
      %c0_149 = arith.constant 0 : index
      %c40_150 = arith.constant 40 : index
      %175 = vector.load %arg13[%174, %c0_149, %c40_150] : memref<16x2x64xbf16, #tpu.memory_space<vmem>>, vector<1x2x12xbf16>
      %176 = vector.shape_cast %175 : vector<1x2x12xbf16> to vector<2x12xbf16>
      %c10_151 = arith.constant 10 : index
      %c12_152 = arith.constant 12 : index
      %177 = vector.load %arg17[%c10_151, %c12_152] : memref<14x36xbf16, #tpu.memory_space<vmem>>, vector<2x12xbf16>
      tpu.vector_store %arg17[%c10_151, %c12_152], %176 {strides = array<i32>} : memref<14x36xbf16, #tpu.memory_space<vmem>>, vector<2x12xbf16>,
      %c2_i32_153 = arith.constant 2 : i32
      %178 = arith.muli %c2_i32_153, %arg21 : i32
      %c2_i32_154 = arith.constant 2 : i32
      %179 = arith.addi %178, %c2_i32_154 : i32
      %180 = arith.index_cast %179 : i32 to index
      %c0_155 = arith.constant 0 : index
      %c40_156 = arith.constant 40 : index
      %181 = vector.load %arg13[%180, %c0_155, %c40_156] : memref<16x2x64xbf16, #tpu.memory_space<vmem>>, vector<1x2x12xbf16>
      %182 = vector.shape_cast %181 : vector<1x2x12xbf16> to vector<2x12xbf16>
      %c10_157 = arith.constant 10 : index
      %c24_158 = arith.constant 24 : index
      %183 = vector.load %arg17[%c10_157, %c24_158] : memref<14x36xbf16, #tpu.memory_space<vmem>>, vector<2x12xbf16>
      tpu.vector_store %arg17[%c10_157, %c24_158], %182 {strides = array<i32>} : memref<14x36xbf16, #tpu.memory_space<vmem>>, vector<2x12xbf16>,
      %c2_i32_159 = arith.constant 2 : i32
      %184 = arith.muli %c2_i32_159, %arg21 : i32
      %c0_i32_160 = arith.constant 0 : i32
      %185 = arith.addi %184, %c0_i32_160 : i32
      %186 = arith.index_cast %185 : i32 to index
      %c0_161 = arith.constant 0 : index
      %c48 = arith.constant 48 : index
      %187 = vector.load %arg13[%186, %c0_161, %c48] : memref<16x2x64xbf16, #tpu.memory_space<vmem>>, vector<1x2x12xbf16>
      %188 = vector.shape_cast %187 : vector<1x2x12xbf16> to vector<2x12xbf16>
      %c12_162 = arith.constant 12 : index
      %c0_163 = arith.constant 0 : index
      %189 = vector.load %arg17[%c12_162, %c0_163] : memref<14x36xbf16, #tpu.memory_space<vmem>>, vector<2x12xbf16>
      tpu.vector_store %arg17[%c12_162, %c0_163], %188 {strides = array<i32>} : memref<14x36xbf16, #tpu.memory_space<vmem>>, vector<2x12xbf16>,
      %c2_i32_164 = arith.constant 2 : i32
      %190 = arith.muli %c2_i32_164, %arg21 : i32
      %c1_i32_165 = arith.constant 1 : i32
      %191 = arith.addi %190, %c1_i32_165 : i32
      %192 = arith.index_cast %191 : i32 to index
      %c0_166 = arith.constant 0 : index
      %c48_167 = arith.constant 48 : index
      %193 = vector.load %arg13[%192, %c0_166, %c48_167] : memref<16x2x64xbf16, #tpu.memory_space<vmem>>, vector<1x2x12xbf16>
      %194 = vector.shape_cast %193 : vector<1x2x12xbf16> to vector<2x12xbf16>
      %c12_168 = arith.constant 12 : index
      %c12_169 = arith.constant 12 : index
      %195 = vector.load %arg17[%c12_168, %c12_169] : memref<14x36xbf16, #tpu.memory_space<vmem>>, vector<2x12xbf16>
      tpu.vector_store %arg17[%c12_168, %c12_169], %194 {strides = array<i32>} : memref<14x36xbf16, #tpu.memory_space<vmem>>, vector<2x12xbf16>,
      %c2_i32_170 = arith.constant 2 : i32
      %196 = arith.muli %c2_i32_170, %arg21 : i32
      %c2_i32_171 = arith.constant 2 : i32
      %197 = arith.addi %196, %c2_i32_171 : i32
      %198 = arith.index_cast %197 : i32 to index
      %c0_172 = arith.constant 0 : index
      %c48_173 = arith.constant 48 : index
      %199 = vector.load %arg13[%198, %c0_172, %c48_173] : memref<16x2x64xbf16, #tpu.memory_space<vmem>>, vector<1x2x12xbf16>
      %200 = vector.shape_cast %199 : vector<1x2x12xbf16> to vector<2x12xbf16>
      %c12_174 = arith.constant 12 : index
      %c24_175 = arith.constant 24 : index
      %201 = vector.load %arg17[%c12_174, %c24_175] : memref<14x36xbf16, #tpu.memory_space<vmem>>, vector<2x12xbf16>
      tpu.vector_store %arg17[%c12_174, %c24_175], %200 {strides = array<i32>} : memref<14x36xbf16, #tpu.memory_space<vmem>>, vector<2x12xbf16>,
      %c0_176 = arith.constant 0 : index
      %c0_177 = arith.constant 0 : index
      %202 = vector.load %arg17[%c0_176, %c0_177] : memref<14x36xbf16, #tpu.memory_space<vmem>>, vector<14x36xbf16>
      %c0_178 = arith.constant 0 : index
      %c0_179 = arith.constant 0 : index
      %203 = vector.load %arg2[%c0_178, %c0_179] : memref<36x32xbf16, #tpu.memory_space<vmem>>, vector<36x32xbf16>
      %cst_180 = arith.constant dense<0.000000e+00> : vector<14x32xf32>
      %204 = tpu.matmul %202, %203, %cst_180 {dimension_numbers = #tpu.dot_dimension_numbers<[1], [0], [0], [1], [0, 0, 1, 1], [], []>} : vector<14x36xbf16>, vector<36x32xbf16>, vector<14x32xf32> -> vector<14x32xf32>
      %c0_181 = arith.constant 0 : index
      %c0_182 = arith.constant 0 : index
      %205 = vector.load %arg3[%c0_181, %c0_182] : memref<1x32xf32, #tpu.memory_space<vmem>>, vector<1x32xf32>
      %206 = vector.broadcast %205 : vector<1x32xf32> to vector<14x32xf32>
      %207 = arith.addf %204, %206 : vector<14x32xf32>
      %cst_183 = arith.constant 0.000000e+00 : f32
      %208 = vector.broadcast %cst_183 : f32 to vector<14x32xf32>
      %209 = arith.maximumf %207, %208 : vector<14x32xf32>
      %210 = arith.truncf %209 : vector<14x32xf32> to vector<14x32xbf16>
      %211 = vector.extract_strided_slice %210 {offsets = [0, 0], sizes = [2, 32], strides = [1, 1]} : vector<14x32xbf16> to vector<2x32xbf16>
      %212 = arith.index_cast %arg21 : i32 to index
      %c0_184 = arith.constant 0 : index
      %c0_185 = arith.constant 0 : index
      %213 = vector.load %arg14[%212, %c0_184, %c0_185] : memref<7x2x224xbf16, #tpu.memory_space<vmem>>, vector<1x2x32xbf16>
      %214 = vector.shape_cast %213 : vector<1x2x32xbf16> to vector<2x32xbf16>
      %215 = vector.shape_cast %211 : vector<2x32xbf16> to vector<1x2x32xbf16>
      tpu.vector_store %arg14[%212, %c0_184, %c0_185], %215 {strides = array<i32>} : memref<7x2x224xbf16, #tpu.memory_space<vmem>>, vector<1x2x32xbf16>,
      %216 = vector.extract_strided_slice %210 {offsets = [2, 0], sizes = [2, 32], strides = [1, 1]} : vector<14x32xbf16> to vector<2x32xbf16>
      %217 = arith.index_cast %arg21 : i32 to index
      %c0_186 = arith.constant 0 : index
      %c32_187 = arith.constant 32 : index
      %218 = vector.load %arg14[%217, %c0_186, %c32_187] : memref<7x2x224xbf16, #tpu.memory_space<vmem>>, vector<1x2x32xbf16>
      %219 = vector.shape_cast %218 : vector<1x2x32xbf16> to vector<2x32xbf16>
      %220 = vector.shape_cast %216 : vector<2x32xbf16> to vector<1x2x32xbf16>
      tpu.vector_store %arg14[%217, %c0_186, %c32_187], %220 {strides = array<i32>} : memref<7x2x224xbf16, #tpu.memory_space<vmem>>, vector<1x2x32xbf16>,
      %221 = vector.extract_strided_slice %210 {offsets = [4, 0], sizes = [2, 32], strides = [1, 1]} : vector<14x32xbf16> to vector<2x32xbf16>
      %222 = arith.index_cast %arg21 : i32 to index
      %c0_188 = arith.constant 0 : index
      %c64 = arith.constant 64 : index
      %223 = vector.load %arg14[%222, %c0_188, %c64] : memref<7x2x224xbf16, #tpu.memory_space<vmem>>, vector<1x2x32xbf16>
      %224 = vector.shape_cast %223 : vector<1x2x32xbf16> to vector<2x32xbf16>
      %225 = vector.shape_cast %221 : vector<2x32xbf16> to vector<1x2x32xbf16>
      tpu.vector_store %arg14[%222, %c0_188, %c64], %225 {strides = array<i32>} : memref<7x2x224xbf16, #tpu.memory_space<vmem>>, vector<1x2x32xbf16>,
      %226 = vector.extract_strided_slice %210 {offsets = [6, 0], sizes = [2, 32], strides = [1, 1]} : vector<14x32xbf16> to vector<2x32xbf16>
      %227 = arith.index_cast %arg21 : i32 to index
      %c0_189 = arith.constant 0 : index
      %c96_190 = arith.constant 96 : index
      %228 = vector.load %arg14[%227, %c0_189, %c96_190] : memref<7x2x224xbf16, #tpu.memory_space<vmem>>, vector<1x2x32xbf16>
      %229 = vector.shape_cast %228 : vector<1x2x32xbf16> to vector<2x32xbf16>
      %230 = vector.shape_cast %226 : vector<2x32xbf16> to vector<1x2x32xbf16>
      tpu.vector_store %arg14[%227, %c0_189, %c96_190], %230 {strides = array<i32>} : memref<7x2x224xbf16, #tpu.memory_space<vmem>>, vector<1x2x32xbf16>,
      %231 = vector.extract_strided_slice %210 {offsets = [8, 0], sizes = [2, 32], strides = [1, 1]} : vector<14x32xbf16> to vector<2x32xbf16>
      %232 = arith.index_cast %arg21 : i32 to index
      %c0_191 = arith.constant 0 : index
      %c128 = arith.constant 128 : index
      %233 = vector.load %arg14[%232, %c0_191, %c128] : memref<7x2x224xbf16, #tpu.memory_space<vmem>>, vector<1x2x32xbf16>
      %234 = vector.shape_cast %233 : vector<1x2x32xbf16> to vector<2x32xbf16>
      %235 = vector.shape_cast %231 : vector<2x32xbf16> to vector<1x2x32xbf16>
      tpu.vector_store %arg14[%232, %c0_191, %c128], %235 {strides = array<i32>} : memref<7x2x224xbf16, #tpu.memory_space<vmem>>, vector<1x2x32xbf16>,
      %236 = vector.extract_strided_slice %210 {offsets = [10, 0], sizes = [2, 32], strides = [1, 1]} : vector<14x32xbf16> to vector<2x32xbf16>
      %237 = arith.index_cast %arg21 : i32 to index
      %c0_192 = arith.constant 0 : index
      %c160 = arith.constant 160 : index
      %238 = vector.load %arg14[%237, %c0_192, %c160] : memref<7x2x224xbf16, #tpu.memory_space<vmem>>, vector<1x2x32xbf16>
      %239 = vector.shape_cast %238 : vector<1x2x32xbf16> to vector<2x32xbf16>
      %240 = vector.shape_cast %236 : vector<2x32xbf16> to vector<1x2x32xbf16>
      tpu.vector_store %arg14[%237, %c0_192, %c160], %240 {strides = array<i32>} : memref<7x2x224xbf16, #tpu.memory_space<vmem>>, vector<1x2x32xbf16>,
      %241 = vector.extract_strided_slice %210 {offsets = [12, 0], sizes = [2, 32], strides = [1, 1]} : vector<14x32xbf16> to vector<2x32xbf16>
      %242 = arith.index_cast %arg21 : i32 to index
      %c0_193 = arith.constant 0 : index
      %c192_194 = arith.constant 192 : index
      %243 = vector.load %arg14[%242, %c0_193, %c192_194] : memref<7x2x224xbf16, #tpu.memory_space<vmem>>, vector<1x2x32xbf16>
      %244 = vector.shape_cast %243 : vector<1x2x32xbf16> to vector<2x32xbf16>
      %245 = vector.shape_cast %241 : vector<2x32xbf16> to vector<1x2x32xbf16>
      tpu.vector_store %arg14[%242, %c0_193, %c192_194], %245 {strides = array<i32>} : memref<7x2x224xbf16, #tpu.memory_space<vmem>>, vector<1x2x32xbf16>,
    }
    %c7_i32_7 = arith.constant 7 : i32
    %c0_i32_8 = arith.constant 0 : i32
    %c3_i32 = arith.constant 3 : i32
    %12 = arith.addi %c0_i32_8, %c3_i32 : i32
    %c1_i32_9 = arith.constant 1 : i32
    scf.for %arg21 = %c0_i32_8 to %12 step %c1_i32_9  : i32 {
      %c2_i32_61 = arith.constant 2 : i32
      %76 = arith.muli %c2_i32_61, %arg21 : i32
      %c0_i32_62 = arith.constant 0 : i32
      %77 = arith.addi %76, %c0_i32_62 : i32
      %78 = arith.index_cast %77 : i32 to index
      %c0_63 = arith.constant 0 : index
      %c0_64 = arith.constant 0 : index
      %79 = vector.load %arg14[%78, %c0_63, %c0_64] : memref<7x2x224xbf16, #tpu.memory_space<vmem>>, vector<1x2x96xbf16>
      %80 = vector.shape_cast %79 : vector<1x2x96xbf16> to vector<2x96xbf16>
      %c0_65 = arith.constant 0 : index
      %c0_66 = arith.constant 0 : index
      %81 = vector.load %arg18[%c0_65, %c0_66] : memref<6x288xbf16, #tpu.memory_space<vmem>>, vector<2x96xbf16>
      tpu.vector_store %arg18[%c0_65, %c0_66], %80 {strides = array<i32>} : memref<6x288xbf16, #tpu.memory_space<vmem>>, vector<2x96xbf16>,
      %c2_i32_67 = arith.constant 2 : i32
      %82 = arith.muli %c2_i32_67, %arg21 : i32
      %c1_i32_68 = arith.constant 1 : i32
      %83 = arith.addi %82, %c1_i32_68 : i32
      %84 = arith.index_cast %83 : i32 to index
      %c0_69 = arith.constant 0 : index
      %c0_70 = arith.constant 0 : index
      %85 = vector.load %arg14[%84, %c0_69, %c0_70] : memref<7x2x224xbf16, #tpu.memory_space<vmem>>, vector<1x2x96xbf16>
      %86 = vector.shape_cast %85 : vector<1x2x96xbf16> to vector<2x96xbf16>
      %c0_71 = arith.constant 0 : index
      %c96_72 = arith.constant 96 : index
      %87 = vector.load %arg18[%c0_71, %c96_72] : memref<6x288xbf16, #tpu.memory_space<vmem>>, vector<2x96xbf16>
      tpu.vector_store %arg18[%c0_71, %c96_72], %86 {strides = array<i32>} : memref<6x288xbf16, #tpu.memory_space<vmem>>, vector<2x96xbf16>,
      %c2_i32_73 = arith.constant 2 : i32
      %88 = arith.muli %c2_i32_73, %arg21 : i32
      %c2_i32_74 = arith.constant 2 : i32
      %89 = arith.addi %88, %c2_i32_74 : i32
      %90 = arith.index_cast %89 : i32 to index
      %c0_75 = arith.constant 0 : index
      %c0_76 = arith.constant 0 : index
      %91 = vector.load %arg14[%90, %c0_75, %c0_76] : memref<7x2x224xbf16, #tpu.memory_space<vmem>>, vector<1x2x96xbf16>
      %92 = vector.shape_cast %91 : vector<1x2x96xbf16> to vector<2x96xbf16>
      %c0_77 = arith.constant 0 : index
      %c192_78 = arith.constant 192 : index
      %93 = vector.load %arg18[%c0_77, %c192_78] : memref<6x288xbf16, #tpu.memory_space<vmem>>, vector<2x96xbf16>
      tpu.vector_store %arg18[%c0_77, %c192_78], %92 {strides = array<i32>} : memref<6x288xbf16, #tpu.memory_space<vmem>>, vector<2x96xbf16>,
      %c2_i32_79 = arith.constant 2 : i32
      %94 = arith.muli %c2_i32_79, %arg21 : i32
      %c0_i32_80 = arith.constant 0 : i32
      %95 = arith.addi %94, %c0_i32_80 : i32
      %96 = arith.index_cast %95 : i32 to index
      %c0_81 = arith.constant 0 : index
      %c64 = arith.constant 64 : index
      %97 = vector.load %arg14[%96, %c0_81, %c64] : memref<7x2x224xbf16, #tpu.memory_space<vmem>>, vector<1x2x96xbf16>
      %98 = vector.shape_cast %97 : vector<1x2x96xbf16> to vector<2x96xbf16>
      %c2 = arith.constant 2 : index
      %c0_82 = arith.constant 0 : index
      %99 = vector.load %arg18[%c2, %c0_82] : memref<6x288xbf16, #tpu.memory_space<vmem>>, vector<2x96xbf16>
      tpu.vector_store %arg18[%c2, %c0_82], %98 {strides = array<i32>} : memref<6x288xbf16, #tpu.memory_space<vmem>>, vector<2x96xbf16>,
      %c2_i32_83 = arith.constant 2 : i32
      %100 = arith.muli %c2_i32_83, %arg21 : i32
      %c1_i32_84 = arith.constant 1 : i32
      %101 = arith.addi %100, %c1_i32_84 : i32
      %102 = arith.index_cast %101 : i32 to index
      %c0_85 = arith.constant 0 : index
      %c64_86 = arith.constant 64 : index
      %103 = vector.load %arg14[%102, %c0_85, %c64_86] : memref<7x2x224xbf16, #tpu.memory_space<vmem>>, vector<1x2x96xbf16>
      %104 = vector.shape_cast %103 : vector<1x2x96xbf16> to vector<2x96xbf16>
      %c2_87 = arith.constant 2 : index
      %c96_88 = arith.constant 96 : index
      %105 = vector.load %arg18[%c2_87, %c96_88] : memref<6x288xbf16, #tpu.memory_space<vmem>>, vector<2x96xbf16>
      tpu.vector_store %arg18[%c2_87, %c96_88], %104 {strides = array<i32>} : memref<6x288xbf16, #tpu.memory_space<vmem>>, vector<2x96xbf16>,
      %c2_i32_89 = arith.constant 2 : i32
      %106 = arith.muli %c2_i32_89, %arg21 : i32
      %c2_i32_90 = arith.constant 2 : i32
      %107 = arith.addi %106, %c2_i32_90 : i32
      %108 = arith.index_cast %107 : i32 to index
      %c0_91 = arith.constant 0 : index
      %c64_92 = arith.constant 64 : index
      %109 = vector.load %arg14[%108, %c0_91, %c64_92] : memref<7x2x224xbf16, #tpu.memory_space<vmem>>, vector<1x2x96xbf16>
      %110 = vector.shape_cast %109 : vector<1x2x96xbf16> to vector<2x96xbf16>
      %c2_93 = arith.constant 2 : index
      %c192_94 = arith.constant 192 : index
      %111 = vector.load %arg18[%c2_93, %c192_94] : memref<6x288xbf16, #tpu.memory_space<vmem>>, vector<2x96xbf16>
      tpu.vector_store %arg18[%c2_93, %c192_94], %110 {strides = array<i32>} : memref<6x288xbf16, #tpu.memory_space<vmem>>, vector<2x96xbf16>,
      %c2_i32_95 = arith.constant 2 : i32
      %112 = arith.muli %c2_i32_95, %arg21 : i32
      %c0_i32_96 = arith.constant 0 : i32
      %113 = arith.addi %112, %c0_i32_96 : i32
      %114 = arith.index_cast %113 : i32 to index
      %c0_97 = arith.constant 0 : index
      %c128 = arith.constant 128 : index
      %115 = vector.load %arg14[%114, %c0_97, %c128] : memref<7x2x224xbf16, #tpu.memory_space<vmem>>, vector<1x2x96xbf16>
      %116 = vector.shape_cast %115 : vector<1x2x96xbf16> to vector<2x96xbf16>
      %c4 = arith.constant 4 : index
      %c0_98 = arith.constant 0 : index
      %117 = vector.load %arg18[%c4, %c0_98] : memref<6x288xbf16, #tpu.memory_space<vmem>>, vector<2x96xbf16>
      tpu.vector_store %arg18[%c4, %c0_98], %116 {strides = array<i32>} : memref<6x288xbf16, #tpu.memory_space<vmem>>, vector<2x96xbf16>,
      %c2_i32_99 = arith.constant 2 : i32
      %118 = arith.muli %c2_i32_99, %arg21 : i32
      %c1_i32_100 = arith.constant 1 : i32
      %119 = arith.addi %118, %c1_i32_100 : i32
      %120 = arith.index_cast %119 : i32 to index
      %c0_101 = arith.constant 0 : index
      %c128_102 = arith.constant 128 : index
      %121 = vector.load %arg14[%120, %c0_101, %c128_102] : memref<7x2x224xbf16, #tpu.memory_space<vmem>>, vector<1x2x96xbf16>
      %122 = vector.shape_cast %121 : vector<1x2x96xbf16> to vector<2x96xbf16>
      %c4_103 = arith.constant 4 : index
      %c96_104 = arith.constant 96 : index
      %123 = vector.load %arg18[%c4_103, %c96_104] : memref<6x288xbf16, #tpu.memory_space<vmem>>, vector<2x96xbf16>
      tpu.vector_store %arg18[%c4_103, %c96_104], %122 {strides = array<i32>} : memref<6x288xbf16, #tpu.memory_space<vmem>>, vector<2x96xbf16>,
      %c2_i32_105 = arith.constant 2 : i32
      %124 = arith.muli %c2_i32_105, %arg21 : i32
      %c2_i32_106 = arith.constant 2 : i32
      %125 = arith.addi %124, %c2_i32_106 : i32
      %126 = arith.index_cast %125 : i32 to index
      %c0_107 = arith.constant 0 : index
      %c128_108 = arith.constant 128 : index
      %127 = vector.load %arg14[%126, %c0_107, %c128_108] : memref<7x2x224xbf16, #tpu.memory_space<vmem>>, vector<1x2x96xbf16>
      %128 = vector.shape_cast %127 : vector<1x2x96xbf16> to vector<2x96xbf16>
      %c4_109 = arith.constant 4 : index
      %c192_110 = arith.constant 192 : index
      %129 = vector.load %arg18[%c4_109, %c192_110] : memref<6x288xbf16, #tpu.memory_space<vmem>>, vector<2x96xbf16>
      tpu.vector_store %arg18[%c4_109, %c192_110], %128 {strides = array<i32>} : memref<6x288xbf16, #tpu.memory_space<vmem>>, vector<2x96xbf16>,
      %c0_111 = arith.constant 0 : index
      %c0_112 = arith.constant 0 : index
      %130 = vector.load %arg18[%c0_111, %c0_112] : memref<6x288xbf16, #tpu.memory_space<vmem>>, vector<6x288xbf16>
      %c0_113 = arith.constant 0 : index
      %c0_114 = arith.constant 0 : index
      %131 = vector.load %arg4[%c0_113, %c0_114] : memref<288x32xbf16, #tpu.memory_space<vmem>>, vector<288x32xbf16>
      %cst_115 = arith.constant dense<0.000000e+00> : vector<6x32xf32>
      %132 = tpu.matmul %130, %131, %cst_115 {dimension_numbers = #tpu.dot_dimension_numbers<[1], [0], [0], [1], [0, 0, 1, 1], [], []>} : vector<6x288xbf16>, vector<288x32xbf16>, vector<6x32xf32> -> vector<6x32xf32>
      %c0_116 = arith.constant 0 : index
      %c0_117 = arith.constant 0 : index
      %133 = vector.load %arg5[%c0_116, %c0_117] : memref<1x32xf32, #tpu.memory_space<vmem>>, vector<1x32xf32>
      %134 = vector.broadcast %133 : vector<1x32xf32> to vector<6x32xf32>
      %135 = arith.addf %132, %134 : vector<6x32xf32>
      %cst_118 = arith.constant 0.000000e+00 : f32
      %136 = vector.broadcast %cst_118 : f32 to vector<6x32xf32>
      %137 = arith.maximumf %135, %136 : vector<6x32xf32>
      %138 = arith.truncf %137 : vector<6x32xf32> to vector<6x32xbf16>
      %139 = vector.extract_strided_slice %138 {offsets = [0, 0], sizes = [2, 32], strides = [1, 1]} : vector<6x32xbf16> to vector<2x32xbf16>
      %140 = arith.index_cast %arg21 : i32 to index
      %c0_119 = arith.constant 0 : index
      %c0_120 = arith.constant 0 : index
      %141 = vector.load %arg15[%140, %c0_119, %c0_120] : memref<3x2x96xbf16, #tpu.memory_space<vmem>>, vector<1x2x32xbf16>
      %142 = vector.shape_cast %141 : vector<1x2x32xbf16> to vector<2x32xbf16>
      %143 = vector.shape_cast %139 : vector<2x32xbf16> to vector<1x2x32xbf16>
      tpu.vector_store %arg15[%140, %c0_119, %c0_120], %143 {strides = array<i32>} : memref<3x2x96xbf16, #tpu.memory_space<vmem>>, vector<1x2x32xbf16>,
      %144 = vector.extract_strided_slice %138 {offsets = [2, 0], sizes = [2, 32], strides = [1, 1]} : vector<6x32xbf16> to vector<2x32xbf16>
      %145 = arith.index_cast %arg21 : i32 to index
      %c0_121 = arith.constant 0 : index
      %c32 = arith.constant 32 : index
      %146 = vector.load %arg15[%145, %c0_121, %c32] : memref<3x2x96xbf16, #tpu.memory_space<vmem>>, vector<1x2x32xbf16>
      %147 = vector.shape_cast %146 : vector<1x2x32xbf16> to vector<2x32xbf16>
      %148 = vector.shape_cast %144 : vector<2x32xbf16> to vector<1x2x32xbf16>
      tpu.vector_store %arg15[%145, %c0_121, %c32], %148 {strides = array<i32>} : memref<3x2x96xbf16, #tpu.memory_space<vmem>>, vector<1x2x32xbf16>,
      %149 = vector.extract_strided_slice %138 {offsets = [4, 0], sizes = [2, 32], strides = [1, 1]} : vector<6x32xbf16> to vector<2x32xbf16>
      %150 = arith.index_cast %arg21 : i32 to index
      %c0_122 = arith.constant 0 : index
      %c64_123 = arith.constant 64 : index
      %151 = vector.load %arg15[%150, %c0_122, %c64_123] : memref<3x2x96xbf16, #tpu.memory_space<vmem>>, vector<1x2x32xbf16>
      %152 = vector.shape_cast %151 : vector<1x2x32xbf16> to vector<2x32xbf16>
      %153 = vector.shape_cast %149 : vector<2x32xbf16> to vector<1x2x32xbf16>
      tpu.vector_store %arg15[%150, %c0_122, %c64_123], %153 {strides = array<i32>} : memref<3x2x96xbf16, #tpu.memory_space<vmem>>, vector<1x2x32xbf16>,
    }
    %c3_i32_10 = arith.constant 3 : i32
    %c0_i32_11 = arith.constant 0 : i32
    %c2_i32 = arith.constant 2 : i32
    %13 = arith.muli %c2_i32, %c0_i32_11 : i32
    %c0_i32_12 = arith.constant 0 : i32
    %14 = arith.addi %13, %c0_i32_12 : i32
    %15 = arith.index_cast %14 : i32 to index
    %c0_13 = arith.constant 0 : index
    %c0_14 = arith.constant 0 : index
    %16 = vector.load %arg15[%15, %c0_13, %c0_14] : memref<3x2x96xbf16, #tpu.memory_space<vmem>>, vector<1x2x96xbf16>
    %17 = vector.shape_cast %16 : vector<1x2x96xbf16> to vector<2x96xbf16>
    %c0_15 = arith.constant 0 : index
    %c0_16 = arith.constant 0 : index
    %18 = vector.load %arg19[%c0_15, %c0_16] : memref<2x288xbf16, #tpu.memory_space<vmem>>, vector<2x96xbf16>
    tpu.vector_store %arg19[%c0_15, %c0_16], %17 {strides = array<i32>} : memref<2x288xbf16, #tpu.memory_space<vmem>>, vector<2x96xbf16>,
    %c2_i32_17 = arith.constant 2 : i32
    %19 = arith.muli %c2_i32_17, %c0_i32_11 : i32
    %c1_i32_18 = arith.constant 1 : i32
    %20 = arith.addi %19, %c1_i32_18 : i32
    %21 = arith.index_cast %20 : i32 to index
    %c0_19 = arith.constant 0 : index
    %c0_20 = arith.constant 0 : index
    %22 = vector.load %arg15[%21, %c0_19, %c0_20] : memref<3x2x96xbf16, #tpu.memory_space<vmem>>, vector<1x2x96xbf16>
    %23 = vector.shape_cast %22 : vector<1x2x96xbf16> to vector<2x96xbf16>
    %c0_21 = arith.constant 0 : index
    %c96 = arith.constant 96 : index
    %24 = vector.load %arg19[%c0_21, %c96] : memref<2x288xbf16, #tpu.memory_space<vmem>>, vector<2x96xbf16>
    tpu.vector_store %arg19[%c0_21, %c96], %23 {strides = array<i32>} : memref<2x288xbf16, #tpu.memory_space<vmem>>, vector<2x96xbf16>,
    %c2_i32_22 = arith.constant 2 : i32
    %25 = arith.muli %c2_i32_22, %c0_i32_11 : i32
    %c2_i32_23 = arith.constant 2 : i32
    %26 = arith.addi %25, %c2_i32_23 : i32
    %27 = arith.index_cast %26 : i32 to index
    %c0_24 = arith.constant 0 : index
    %c0_25 = arith.constant 0 : index
    %28 = vector.load %arg15[%27, %c0_24, %c0_25] : memref<3x2x96xbf16, #tpu.memory_space<vmem>>, vector<1x2x96xbf16>
    %29 = vector.shape_cast %28 : vector<1x2x96xbf16> to vector<2x96xbf16>
    %c0_26 = arith.constant 0 : index
    %c192 = arith.constant 192 : index
    %30 = vector.load %arg19[%c0_26, %c192] : memref<2x288xbf16, #tpu.memory_space<vmem>>, vector<2x96xbf16>
    tpu.vector_store %arg19[%c0_26, %c192], %29 {strides = array<i32>} : memref<2x288xbf16, #tpu.memory_space<vmem>>, vector<2x96xbf16>,
    %c0_27 = arith.constant 0 : index
    %c0_28 = arith.constant 0 : index
    %31 = vector.load %arg19[%c0_27, %c0_28] : memref<2x288xbf16, #tpu.memory_space<vmem>>, vector<2x288xbf16>
    %c0_29 = arith.constant 0 : index
    %c0_30 = arith.constant 0 : index
    %32 = vector.load %arg6[%c0_29, %c0_30] : memref<288x32xbf16, #tpu.memory_space<vmem>>, vector<288x32xbf16>
    %cst_31 = arith.constant dense<0.000000e+00> : vector<2x32xf32>
    %33 = tpu.matmul %31, %32, %cst_31 {dimension_numbers = #tpu.dot_dimension_numbers<[1], [0], [0], [1], [0, 0, 1, 1], [], []>} : vector<2x288xbf16>, vector<288x32xbf16>, vector<2x32xf32> -> vector<2x32xf32>
    %c0_32 = arith.constant 0 : index
    %c0_33 = arith.constant 0 : index
    %34 = vector.load %arg7[%c0_32, %c0_33] : memref<1x32xf32, #tpu.memory_space<vmem>>, vector<1x32xf32>
    %35 = vector.broadcast %34 : vector<1x32xf32> to vector<2x32xf32>
    %36 = arith.addf %33, %35 : vector<2x32xf32>
    %cst_34 = arith.constant 0.000000e+00 : f32
    %37 = vector.broadcast %cst_34 : f32 to vector<2x32xf32>
    %38 = arith.maximumf %36, %37 : vector<2x32xf32>
    %39 = arith.truncf %38 : vector<2x32xf32> to vector<2x32xbf16>
    %40 = arith.index_cast %c0_i32_11 : i32 to index
    %c0_35 = arith.constant 0 : index
    %c0_36 = arith.constant 0 : index
    %41 = vector.load %arg16[%40, %c0_35, %c0_36] : memref<1x2x32xbf16, #tpu.memory_space<vmem>>, vector<1x2x32xbf16>
    %42 = vector.shape_cast %41 : vector<1x2x32xbf16> to vector<2x32xbf16>
    %43 = vector.shape_cast %39 : vector<2x32xbf16> to vector<1x2x32xbf16>
    tpu.vector_store %arg16[%40, %c0_35, %c0_36], %43 {strides = array<i32>} : memref<1x2x32xbf16, #tpu.memory_space<vmem>>, vector<1x2x32xbf16>,
    %c1_i32_37 = arith.constant 1 : i32
    %c0_38 = arith.constant 0 : index
    %c0_39 = arith.constant 0 : index
    %c0_40 = arith.constant 0 : index
    %44 = vector.load %arg16[%c0_38, %c0_39, %c0_40] : memref<1x2x32xbf16, #tpu.memory_space<vmem>>, vector<1x2x32xbf16>
    %45 = vector.shape_cast %44 : vector<1x2x32xbf16> to vector<2x32xbf16>
    %c0_41 = arith.constant 0 : index
    %c0_42 = arith.constant 0 : index
    %46 = vector.load %arg20[%c0_41, %c0_42] : memref<2x32xbf16, #tpu.memory_space<vmem>>, vector<2x32xbf16>
    tpu.vector_store %arg20[%c0_41, %c0_42], %45 {strides = array<i32>} : memref<2x32xbf16, #tpu.memory_space<vmem>>, vector<2x32xbf16>,
    %c0_43 = arith.constant 0 : index
    %c0_44 = arith.constant 0 : index
    %47 = vector.load %arg20[%c0_43, %c0_44] : memref<2x32xbf16, #tpu.memory_space<vmem>>, vector<2x32xbf16>
    %c0_45 = arith.constant 0 : index
    %c0_46 = arith.constant 0 : index
    %48 = vector.load %arg8[%c0_45, %c0_46] : memref<32x256xbf16, #tpu.memory_space<vmem>>, vector<32x256xbf16>
    %cst_47 = arith.constant dense<0.000000e+00> : vector<2x256xf32>
    %49 = tpu.matmul %47, %48, %cst_47 {dimension_numbers = #tpu.dot_dimension_numbers<[1], [0], [0], [1], [0, 0, 1, 1], [], []>} : vector<2x32xbf16>, vector<32x256xbf16>, vector<2x256xf32> -> vector<2x256xf32>
    %c0_48 = arith.constant 0 : index
    %c0_49 = arith.constant 0 : index
    %50 = vector.load %arg9[%c0_48, %c0_49] : memref<1x256xf32, #tpu.memory_space<vmem>>, vector<1x256xf32>
    %51 = vector.broadcast %50 : vector<1x256xf32> to vector<2x256xf32>
    %52 = arith.addf %49, %51 : vector<2x256xf32>
    %cst_50 = arith.constant 0.000000e+00 : f32
    %53 = vector.broadcast %cst_50 : f32 to vector<2x256xf32>
    %54 = arith.maximumf %52, %53 : vector<2x256xf32>
    %55 = arith.truncf %54 : vector<2x256xf32> to vector<2x256xbf16>
    %c0_51 = arith.constant 0 : index
    %c0_52 = arith.constant 0 : index
    %56 = vector.load %arg10[%c0_51, %c0_52] : memref<256x128xbf16, #tpu.memory_space<vmem>>, vector<256x128xbf16>
    %cst_53 = arith.constant dense<0.000000e+00> : vector<2x128xf32>
    %57 = tpu.matmul %55, %56, %cst_53 {dimension_numbers = #tpu.dot_dimension_numbers<[1], [0], [0], [1], [0, 0, 1, 1], [], []>} : vector<2x256xbf16>, vector<256x128xbf16>, vector<2x128xf32> -> vector<2x128xf32>
    %c0_54 = arith.constant 0 : index
    %c0_55 = arith.constant 0 : index
    %58 = vector.load %arg11[%c0_54, %c0_55] : memref<1x128xf32, #tpu.memory_space<vmem>>, vector<1x128xf32>
    %59 = vector.broadcast %58 : vector<1x128xf32> to vector<2x128xf32>
    %60 = arith.addf %57, %59 : vector<2x128xf32>
    %cst_56 = arith.constant dense<0xFF800000> : vector<2xf32>
    %61 = vector.multi_reduction <maximumf>, %60, %cst_56 [1] : vector<2x128xf32> to vector<2xf32>
    %62 = vector.shape_cast %61 : vector<2xf32> to vector<2x1xf32>
    %63 = vector.broadcast %62 : vector<2x1xf32> to vector<2x128xf32>
    %64 = arith.subf %60, %63 : vector<2x128xf32>
    %65 = math.exp %64 : vector<2x128xf32>
    %cst_57 = arith.constant dense<0.000000e+00> : vector<2xf32>
    %66 = vector.multi_reduction <add>, %65, %cst_57 [1] : vector<2x128xf32> to vector<2xf32>
    %67 = vector.shape_cast %66 : vector<2xf32> to vector<2x1xf32>
    %68 = tpu.reciprocal %67 {approx = true} : vector<2x1xf32> -> vector<2x1xf32>
    %69 = arith.mulf %67, %68 : vector<2x1xf32>
    %cst_58 = arith.constant 2.000000e+00 : f32
    %70 = vector.broadcast %cst_58 : f32 to vector<2x1xf32>
    %71 = arith.subf %70, %69 : vector<2x1xf32>
    %72 = arith.mulf %68, %71 : vector<2x1xf32>
    %73 = vector.broadcast %72 : vector<2x1xf32> to vector<2x128xf32>
    %74 = arith.mulf %65, %73 : vector<2x128xf32>
    %c0_59 = arith.constant 0 : index
    %c0_60 = arith.constant 0 : index
    %75 = vector.load %arg12[%c0_59, %c0_60] : memref<2x128xf32, #tpu.memory_space<vmem>>, vector<2x128xf32>
    tpu.vector_store %arg12[%c0_59, %c0_60], %74 {strides = array<i32>} : memref<2x128xf32, #tpu.memory_space<vmem>>, vector<2x128xf32>,
    return
  }
  func.func @transform_0(%arg0: i32) -> (i32, i32, i32) {
    %c0_i32 = arith.constant 0 : i32
    %c0_i32_0 = arith.constant 0 : i32
    %c0_i32_1 = arith.constant 0 : i32
    return %c0_i32, %arg0, %c0_i32_0 : i32, i32, i32
  }
  func.func @transform_1(%arg0: i32) -> (i32, i32) {
    %c0_i32 = arith.constant 0 : i32
    %c0_i32_0 = arith.constant 0 : i32
    %c0_i32_1 = arith.constant 0 : i32
    return %c0_i32, %c0_i32_0 : i32, i32
  }
  func.func @transform_2(%arg0: i32) -> (i32, i32) {
    %c0_i32 = arith.constant 0 : i32
    %c0_i32_0 = arith.constant 0 : i32
    %c0_i32_1 = arith.constant 0 : i32
    return %c0_i32, %c0_i32_0 : i32, i32
  }
  func.func @transform_3(%arg0: i32) -> (i32, i32) {
    %c0_i32 = arith.constant 0 : i32
    %c0_i32_0 = arith.constant 0 : i32
    %c0_i32_1 = arith.constant 0 : i32
    return %c0_i32, %c0_i32_0 : i32, i32
  }
  func.func @transform_4(%arg0: i32) -> (i32, i32) {
    %c0_i32 = arith.constant 0 : i32
    %c0_i32_0 = arith.constant 0 : i32
    %c0_i32_1 = arith.constant 0 : i32
    return %c0_i32, %c0_i32_0 : i32, i32
  }
  func.func @transform_5(%arg0: i32) -> (i32, i32) {
    %c0_i32 = arith.constant 0 : i32
    %c0_i32_0 = arith.constant 0 : i32
    %c0_i32_1 = arith.constant 0 : i32
    return %c0_i32, %c0_i32_0 : i32, i32
  }
  func.func @transform_6(%arg0: i32) -> (i32, i32) {
    %c0_i32 = arith.constant 0 : i32
    %c0_i32_0 = arith.constant 0 : i32
    %c0_i32_1 = arith.constant 0 : i32
    return %c0_i32, %c0_i32_0 : i32, i32
  }
  func.func @transform_7(%arg0: i32) -> (i32, i32) {
    %c0_i32 = arith.constant 0 : i32
    %c0_i32_0 = arith.constant 0 : i32
    %c0_i32_1 = arith.constant 0 : i32
    return %c0_i32, %c0_i32_0 : i32, i32
  }
  func.func @transform_8(%arg0: i32) -> (i32, i32) {
    %c0_i32 = arith.constant 0 : i32
    %c0_i32_0 = arith.constant 0 : i32
    %c0_i32_1 = arith.constant 0 : i32
    return %c0_i32, %c0_i32_0 : i32, i32
  }
  func.func @transform_9(%arg0: i32) -> (i32, i32) {
    %c0_i32 = arith.constant 0 : i32
    %c0_i32_0 = arith.constant 0 : i32
    %c0_i32_1 = arith.constant 0 : i32
    return %c0_i32, %c0_i32_0 : i32, i32
  }
  func.func @transform_10(%arg0: i32) -> (i32, i32) {
    %c0_i32 = arith.constant 0 : i32
    %c0_i32_0 = arith.constant 0 : i32
    %c0_i32_1 = arith.constant 0 : i32
    return %c0_i32, %c0_i32_0 : i32, i32
  }
  func.func @transform_11(%arg0: i32) -> (i32, i32) {
    %c0_i32 = arith.constant 0 : i32
    %c0_i32_0 = arith.constant 0 : i32
    return %arg0, %c0_i32 : i32, i32
  }
}

</mosaic_0001>

<llo_original>
// kernel: _net_forward.1
$region0: #{_net_forward.1}
  #allocation0 [shape = 'u32[]', space=smem, size = 0x4, offset = 0x4, fixed_abs, tag = 'smem constant byte address 0x4 - core index']
  #allocation1 [shape = 'u32[144,128]{1,0:T(1,128)}', space=vmem, size = 0x12000, scoped, tag = 'internal scratch']
  #allocation2 [shape = 'bf16[16,2,64]{2,1,0:T(2,128)(2,1)}', space=vmem, size = 0x2000, scoped, tag = 'scratch operand']
  #allocation3 [shape = 'bf16[7,2,224]{2,1,0:T(2,128)(2,1)}', space=vmem, size = 0x1c00, scoped, tag = 'scratch operand']
  #allocation4 [shape = 'bf16[3,2,96]{2,1,0:T(2,128)(2,1)}', space=vmem, size = 0x600, scoped, tag = 'scratch operand']
  #allocation5 [shape = 'bf16[1,2,32]{2,1,0:T(2,128)(2,1)}', space=vmem, size = 0x200, scoped, tag = 'scratch operand']
  #allocation6 [shape = 'bf16[14,36]{1,0:T(8,128)(2,1)}', space=vmem, size = 0x1000, scoped, tag = 'scratch operand']
  #allocation7 [shape = 'bf16[6,288]{1,0:T(8,128)(2,1)}', space=vmem, size = 0x1800, scoped, tag = 'scratch operand']
  #allocation8 [shape = 'bf16[2,288]{1,0:T(2,128)(2,1)}', space=vmem, size = 0x600, scoped, tag = 'scratch operand']
  #allocation9 [shape = 'bf16[2,32]{1,0:T(2,128)(2,1)}', space=vmem, size = 0x200, scoped, tag = 'scratch operand']
  %s0 = inlined_call_operand.vmem [shape: s8[16,2,64], index: 0, kind: input, shape index: {}]
  %s1 = inlined_call_operand.vmem [shape: bf16[36,32], index: 1, kind: input, shape index: {}]
  %s2 = inlined_call_operand.vmem [shape: f32[1,32], index: 2, kind: input, shape index: {}]
  %s3 = inlined_call_operand.vmem [shape: bf16[288,32], index: 3, kind: input, shape index: {}]
  %s4 = inlined_call_operand.vmem [shape: f32[1,32], index: 4, kind: input, shape index: {}]
  %s5 = inlined_call_operand.vmem [shape: bf16[288,32], index: 5, kind: input, shape index: {}]
  %s6 = inlined_call_operand.vmem [shape: f32[1,32], index: 6, kind: input, shape index: {}]
  %s7 = inlined_call_operand.vmem [shape: bf16[32,256], index: 7, kind: input, shape index: {}]
  %s8 = inlined_call_operand.vmem [shape: f32[1,256], index: 8, kind: input, shape index: {}]
  %s9 = inlined_call_operand.vmem [shape: bf16[256,128], index: 9, kind: input, shape index: {}]
  %s10 = inlined_call_operand.vmem [shape: f32[1,128], index: 10, kind: input, shape index: {}]
  %s11 = inlined_call_operand.hbm [shape: f32[2,128], index: 11, kind: output, shape index: {}]
  %s12 = sld [smem:[#allocation0]]
  $region68: #{_net_forward.1} parent=0
    _
  %s14 = ssub.s32 1, %s12
  %s15 = scalar_select 0, %s14, %s12
  $region1: #{_net_forward.1} parent=0
    #allocation10 [shape = 'u8[1024]{0}', space=vmem, size = 0x400, scoped, tag = 'output window, operand 0, single buffered']
    #allocation11 [shape = 's32[1]{0}', space=sflag, size = 0x4, scoped, tag = 'scoped memory for _net_forward.1']
    %16 = vsyncpa [#allocation11], 0
    // Predicated region
    $region2: #{_net_forward.1} parent=1 // pred_check
      _
    $region3: #{_net_forward.1} parent=1 // pred_check_branch
      %18 = sbr.rel (0) target = $region5
    $region4: #{_net_forward.1} parent=1 // pred_region
      _
    $region5: #{_net_forward.1} parent=1 // pred_fallthru
      _
    // Predicated region
    $region6: #{_net_forward.1} parent=1 // pred_check
      _
    $region7: #{_net_forward.1} parent=1 // pred_check_branch
      %20 = sbr.rel (0) target = $region9
    $region8: #{_net_forward.1} parent=1 // pred_region
      _
    $region9: #{_net_forward.1} parent=1 // pred_fallthru
      _
    // Predicated region
    $region10: #{_net_forward.1} parent=1 // pred_check
      _
    $region11: #{_net_forward.1} parent=1 // pred_check_branch
      %22 = sbr.rel (0) target = $region13
    $region12: #{_net_forward.1} parent=1 // pred_region
      _
    $region13: #{_net_forward.1} parent=1 // pred_fallthru
      _
    // Predicated region
    $region14: #{_net_forward.1} parent=1 // pred_check
      _
    $region15: #{_net_forward.1} parent=1 // pred_check_branch
      %24 = sbr.rel (0) target = $region17
    $region16: #{_net_forward.1} parent=1 // pred_region
      _
    $region17: #{_net_forward.1} parent=1 // pred_fallthru
      _
    // Predicated region
    $region18: #{_net_forward.1} parent=1 // pred_check
      _
    $region19: #{_net_forward.1} parent=1 // pred_check_branch
      %26 = sbr.rel (0) target = $region21
    $region20: #{_net_forward.1} parent=1 // pred_region
      _
    $region21: #{_net_forward.1} parent=1 // pred_fallthru
      _
    // Predicated region
    $region22: #{_net_forward.1} parent=1 // pred_check
      _
    $region23: #{_net_forward.1} parent=1 // pred_check_branch
      %28 = sbr.rel (0) target = $region25
    $region24: #{_net_forward.1} parent=1 // pred_region
      _
    $region25: #{_net_forward.1} parent=1 // pred_fallthru
      _
    // Predicated region
    $region26: #{_net_forward.1} parent=1 // pred_check
      _
    $region27: #{_net_forward.1} parent=1 // pred_check_branch
      %30 = sbr.rel (0) target = $region29
    $region28: #{_net_forward.1} parent=1 // pred_region
      _
    $region29: #{_net_forward.1} parent=1 // pred_fallthru
      _
    // Predicated region
    $region30: #{_net_forward.1} parent=1 // pred_check
      _
    $region31: #{_net_forward.1} parent=1 // pred_check_branch
      %32 = sbr.rel (0) target = $region33
    $region32: #{_net_forward.1} parent=1 // pred_region
      _
    $region33: #{_net_forward.1} parent=1 // pred_fallthru
      _
    // Predicated region
    $region34: #{_net_forward.1} parent=1 // pred_check
      _
    $region35: #{_net_forward.1} parent=1 // pred_check_branch
      %34 = sbr.rel (0) target = $region37
    $region36: #{_net_forward.1} parent=1 // pred_region
      _
    $region37: #{_net_forward.1} parent=1 // pred_fallthru
      _
    // Predicated region
    $region38: #{_net_forward.1} parent=1 // pred_check
      _
    $region39: #{_net_forward.1} parent=1 // pred_check_branch
      %36 = sbr.rel (0) target = $region41
    $region40: #{_net_forward.1} parent=1 // pred_region
      _
    $region41: #{_net_forward.1} parent=1 // pred_fallthru
      _
    // Predicated region
    $region42: #{_net_forward.1} parent=1 // pred_check
      _
    $region43: #{_net_forward.1} parent=1 // pred_check_branch
      %38 = sbr.rel (0) target = $region45
    $region44: #{_net_forward.1} parent=1 // pred_region
      _
    $region45: #{_net_forward.1} parent=1 // pred_fallthru
      _
    %v40 = vld [vmem:[%s0] sm:$0x1]
    %v41 = vld [vmem:[%s0 + $0x1] sm:$0x1]
    %v42 = vld [vmem:[%s0 + $0x2] sm:$0x1]
    %v43 = vld [vmem:[%s0 + $0x3] sm:$0x1]
    %v44 = vld [vmem:[%s0 + $0x4] sm:$0x1]
    %v45 = vld [vmem:[%s0 + $0x5] sm:$0x1]
    %v46 = vld [vmem:[%s0 + $0x6] sm:$0x1]
    %v47 = vld [vmem:[%s0 + $0x7] sm:$0x1]
    %v48 = vld [vmem:[%s0 + $0x8] sm:$0x1]
    %v49 = vld [vmem:[%s0 + $0x9] sm:$0x1]
    %v50 = vld [vmem:[%s0 + $0xa] sm:$0x1]
    %v51 = vld [vmem:[%s0 + $0xb] sm:$0x1]
    %v52 = vld [vmem:[%s0 + $0xc] sm:$0x1]
    %v53 = vld [vmem:[%s0 + $0xd] sm:$0x1]
    %v54 = vld [vmem:[%s0 + $0xe] sm:$0x1]
    %v55 = vld [vmem:[%s0 + $0xf] sm:$0x1]
    %v56 = vunpack.c.0.s8 %v40
    %v57 = vunpack.c.0.s8 %v41
    %v58 = vunpack.c.0.s8 %v42
    %v59 = vunpack.c.0.s8 %v43
    %v60 = vunpack.c.0.s8 %v44
    %v61 = vunpack.c.0.s8 %v45
    %v62 = vunpack.c.0.s8 %v46
    %v63 = vunpack.c.0.s8 %v47
    %v64 = vunpack.c.0.s8 %v48
    %v65 = vunpack.c.0.s8 %v49
    %v66 = vunpack.c.0.s8 %v50
    %v67 = vunpack.c.0.s8 %v51
    %v68 = vunpack.c.0.s8 %v52
    %v69 = vunpack.c.0.s8 %v53
    %v70 = vunpack.c.0.s8 %v54
    %v71 = vunpack.c.0.s8 %v55
    %v72 = vcvt.s32.f32 %v56
    %v73 = vcvt.s32.f32 %v57
    %v74 = vcvt.s32.f32 %v58
    %v75 = vcvt.s32.f32 %v59
    %v76 = vcvt.s32.f32 %v60
    %v77 = vcvt.s32.f32 %v61
    %v78 = vcvt.s32.f32 %v62
    %v79 = vcvt.s32.f32 %v63
    %v80 = vcvt.s32.f32 %v64
    %v81 = vcvt.s32.f32 %v65
    %v82 = vcvt.s32.f32 %v66
    %v83 = vcvt.s32.f32 %v67
    %v84 = vcvt.s32.f32 %v68
    %v85 = vcvt.s32.f32 %v69
    %v86 = vcvt.s32.f32 %v70
    %v87 = vcvt.s32.f32 %v71
    %vm88 = vcmp.lt.f32.partialorder %v72, 0.0
    %vm89 = vcmp.lt.f32.partialorder %v73, 0.0
    %vm90 = vcmp.lt.f32.partialorder %v74, 0.0
    %vm91 = vcmp.lt.f32.partialorder %v75, 0.0
    %vm92 = vcmp.lt.f32.partialorder %v76, 0.0
    %vm93 = vcmp.lt.f32.partialorder %v77, 0.0
    %vm94 = vcmp.lt.f32.partialorder %v78, 0.0
    %vm95 = vcmp.lt.f32.partialorder %v79, 0.0
    %vm96 = vcmp.lt.f32.partialorder %v80, 0.0
    %vm97 = vcmp.lt.f32.partialorder %v81, 0.0
    %vm98 = vcmp.lt.f32.partialorder %v82, 0.0
    %vm99 = vcmp.lt.f32.partialorder %v83, 0.0
    %vm100 = vcmp.lt.f32.partialorder %v84, 0.0
    %vm101 = vcmp.lt.f32.partialorder %v85, 0.0
    %vm102 = vcmp.lt.f32.partialorder %v86, 0.0
    %vm103 = vcmp.lt.f32.partialorder %v87, 0.0
    %v104 = vadd.f32 %v72, 256.0
    %v105 = vadd.f32 %v73, 256.0
    %v106 = vadd.f32 %v74, 256.0
    %v107 = vadd.f32 %v75, 256.0
    %v108 = vadd.f32 %v76, 256.0
    %v109 = vadd.f32 %v77, 256.0
    %v110 = vadd.f32 %v78, 256.0
    %v111 = vadd.f32 %v79, 256.0
    %v112 = vadd.f32 %v80, 256.0
    %v113 = vadd.f32 %v81, 256.0
    %v114 = vadd.f32 %v82, 256.0
    %v115 = vadd.f32 %v83, 256.0
    %v116 = vadd.f32 %v84, 256.0
    %v117 = vadd.f32 %v85, 256.0
    %v118 = vadd.f32 %v86, 256.0
    %v119 = vadd.f32 %v87, 256.0
    %v120 = vsel %vm88, %v104, %v72
    %v121 = vsel %vm89, %v105, %v73
    %v122 = vsel %vm90, %v106, %v74
    %v123 = vsel %vm91, %v107, %v75
    %v124 = vsel %vm92, %v108, %v76
    %v125 = vsel %vm93, %v109, %v77
    %v126 = vsel %vm94, %v110, %v78
    %v127 = vsel %vm95, %v111, %v79
    %v128 = vsel %vm96, %v112, %v80
    %v129 = vsel %vm97, %v113, %v81
    %v130 = vsel %vm98, %v114, %v82
    %v131 = vsel %vm99, %v115, %v83
    %v132 = vsel %vm100, %v116, %v84
    %v133 = vsel %vm101, %v117, %v85
    %v134 = vsel %vm102, %v118, %v86
    %v135 = vsel %vm103, %v119, %v87
    %v136 = vmul.f32 %v120, 0.00390625
    %v137 = vmul.f32 %v121, 0.00390625
    %v138 = vmul.f32 %v122, 0.00390625
    %v139 = vmul.f32 %v123, 0.00390625
    %v140 = vmul.f32 %v124, 0.00390625
    %v141 = vmul.f32 %v125, 0.00390625
    %v142 = vmul.f32 %v126, 0.00390625
    %v143 = vmul.f32 %v127, 0.00390625
    %v144 = vmul.f32 %v128, 0.00390625
    %v145 = vmul.f32 %v129, 0.00390625
    %v146 = vmul.f32 %v130, 0.00390625
    %v147 = vmul.f32 %v131, 0.00390625
    %v148 = vmul.f32 %v132, 0.00390625
    %v149 = vmul.f32 %v133, 0.00390625
    %v150 = vmul.f32 %v134, 0.00390625
    %v151 = vmul.f32 %v135, 0.00390625
    %v152 = vpack.c.bf16 %v136, %v136
    %v153 = vpack.c.bf16 %v137, %v137
    %v154 = vpack.c.bf16 %v138, %v138
    %v155 = vpack.c.bf16 %v139, %v139
    %v156 = vpack.c.bf16 %v140, %v140
    %v157 = vpack.c.bf16 %v141, %v141
    %v158 = vpack.c.bf16 %v142, %v142
    %v159 = vpack.c.bf16 %v143, %v143
    %v160 = vpack.c.bf16 %v144, %v144
    %v161 = vpack.c.bf16 %v145, %v145
    %v162 = vpack.c.bf16 %v146, %v146
    %v163 = vpack.c.bf16 %v147, %v147
    %v164 = vpack.c.bf16 %v148, %v148
    %v165 = vpack.c.bf16 %v149, %v149
    %v166 = vpack.c.bf16 %v150, %v150
    %v167 = vpack.c.bf16 %v151, %v151
    %vm168 = vcmask 516096
    %169 = vst.msk [vmem:[#allocation2] sm:$0x1] %vm168, %v152
    %170 = vst.msk [vmem:[#allocation2 + $0x1] sm:$0x1] %vm168, %v153
    %171 = vst.msk [vmem:[#allocation2 + $0x2] sm:$0x1] %vm168, %v154
    %172 = vst.msk [vmem:[#allocation2 + $0x3] sm:$0x1] %vm168, %v155
    %173 = vst.msk [vmem:[#allocation2 + $0x4] sm:$0x1] %vm168, %v156
    %174 = vst.msk [vmem:[#allocation2 + $0x5] sm:$0x1] %vm168, %v157
    %175 = vst.msk [vmem:[#allocation2 + $0x6] sm:$0x1] %vm168, %v158
    %176 = vst.msk [vmem:[#allocation2 + $0x7] sm:$0x1] %vm168, %v159
    %177 = vst.msk [vmem:[#allocation2 + $0x8] sm:$0x1] %vm168, %v160
    %178 = vst.msk [vmem:[#allocation2 + $0x9] sm:$0x1] %vm168, %v161
    %179 = vst.msk [vmem:[#allocation2 + $0xa] sm:$0x1] %vm168, %v162
    %180 = vst.msk [vmem:[#allocation2 + $0xb] sm:$0x1] %vm168, %v163
    %181 = vst.msk [vmem:[#allocation2 + $0xc] sm:$0x1] %vm168, %v164
    %182 = vst.msk [vmem:[#allocation2 + $0xd] sm:$0x1] %vm168, %v165
    %183 = vst.msk [vmem:[#allocation2 + $0xe] sm:$0x1] %vm168, %v166
    %184 = vst.msk [vmem:[#allocation2 + $0xf] sm:$0x1] %vm168, %v167
    loop: start=0, step=1, limit=7
    $region46: #{_net_forward.1} parent=1 // loop_pre_header
      _
    $region47: #{_net_forward.1} parent=1 // loop_header
      %s186 = sphi 0, %s190
      %p187 = scmp.ge.s32.totalorder %s186, 7
    $region48: #{_net_forward.1} parent=1 // loop_header_branch
      %189 = sbr.rel (%p187) target = $region52
    $region49: #{_net_forward.1} parent=1 // loop_body
      %s191 = smul.u32 %s186, 2
      %s192 = scalar_lea.vmem [#allocation2], %s191
      %v193 = vld [vmem:[%s192] sm:$0x1]
      %vm194 = vcmask 90112
      %195 = vst.msk [vmem:[#allocation6] sm:$0x1] %vm194, %v193
      %s196 = sadd.s32 %s191, 1
      %s197 = scalar_lea.vmem [#allocation2], %s196
      %v198 = vld [vmem:[%s197] sm:$0x1]
      %v201 = vunpack.c.l.s4 1935823168
      %v202 = vunpack.c.0.s8 %v201
      %v203 = vlaneseq
      %v204 = vshrl.u32 %v203, 7
      %v205 = vsub.s32 %v202, %v204
      %v206 = vrot.slane %v198, %v205
      %v208 = vunpack.c.l.s4 1935823168
      %v209 = vunpack.c.0.s8 %v208
      %v210 = vlaneseq
      %v211 = vshrl.u32 %v210, 7
      %v212 = vsub.s32 %v209, %v211
      %v213 = vrot.slane %v206, %v212
      %214 = vrot.lane.b32.xlu0 %v213, 12
      %v215 = vpop.permute.xlu0 %214
      %vm217 = vcmask 188512
      %218 = vst.msk [vmem:[#allocation6] sm:$0x1] %vm217, %v215
      %s219 = sadd.s32 %s191, 2
      %s220 = scalar_lea.vmem [#allocation2], %s219
      %v221 = vld [vmem:[%s220] sm:$0x1]
      %v224 = vunpack.c.l.s4 1935823168
      %v225 = vunpack.c.0.s8 %v224
      %v226 = vlaneseq
      %v227 = vshrl.u32 %v226, 7
      %v228 = vsub.s32 %v225, %v227
      %v229 = vrot.slane %v221, %v228
      %v231 = vunpack.c.l.s4 1935823168
      %v232 = vunpack.c.0.s8 %v231
      %v233 = vlaneseq
      %v234 = vshrl.u32 %v233, 7
      %v235 = vsub.s32 %v232, %v234
      %v236 = vrot.slane %v229, %v235
      %237 = vrot.lane.b32.xlu0 %v236, 24
      %v238 = vpop.permute.xlu0 %237
      %vm240 = vcmask 286912
      %241 = vst.msk [vmem:[#allocation6] sm:$0x1] %vm240, %v238
      %v242 = vld [vmem:[%s192] sm:$0x1]
      %v245 = vunpack.c.l.s4 1935823168
      %v246 = vunpack.c.0.s8 %v245
      %v247 = vlaneseq
      %v248 = vshrl.u32 %v247, 7
      %v249 = vsub.s32 %v246, %v248
      %v250 = vrot.slane %v242, %v249
      %v251 = vcombine.low %v250, %v250
      %v253 = vunpack.c.l.s4 1935823168
      %v254 = vunpack.c.0.s8 %v253
      %v255 = vlaneseq
      %v256 = vshrl.u32 %v255, 7
      %v257 = vsub.s32 %v254, %v256
      %v258 = vrot.slane %v251, %v257
      %259 = vrot.lane.b32.xlu0 %v258, 120
      %v260 = vpop.permute.xlu0 %259
      %vm262 = vcmask 91137
      %263 = vst.msk [vmem:[#allocation6] sm:$0x2] %vm262, %v260
      %v264 = vld [vmem:[%s197] sm:$0x1]
      %v267 = vunpack.c.l.s4 1935823168
      %v268 = vunpack.c.0.s8 %v267
      %v269 = vlaneseq
      %v270 = vshrl.u32 %v269, 7
      %v271 = vsub.s32 %v268, %v270
      %v272 = vrot.slane %v264, %v271
      %v273 = vcombine.low %v272, %v272
      %v275 = vunpack.c.l.s4 1935823168
      %v276 = vunpack.c.0.s8 %v275
      %v277 = vlaneseq
      %v278 = vshrl.u32 %v277, 7
      %v279 = vsub.s32 %v276, %v278
      %v280 = vrot.slane %v273, %v279
      %281 = vrot.lane.b32.xlu0 %v280, 4
      %v282 = vpop.permute.xlu0 %281
      %vm284 = vcmask 189537
      %285 = vst.msk [vmem:[#allocation6] sm:$0x2] %vm284, %v282
      %v286 = vld [vmem:[%s220] sm:$0x1]
      %v289 = vunpack.c.l.s4 1935823168
      %v290 = vunpack.c.0.s8 %v289
      %v291 = vlaneseq
      %v292 = vshrl.u32 %v291, 7
      %v293 = vsub.s32 %v290, %v292
      %v294 = vrot.slane %v286, %v293
      %v295 = vcombine.low %v294, %v294
      %v297 = vunpack.c.l.s4 1935823168
      %v298 = vunpack.c.0.s8 %v297
      %v299 = vlaneseq
      %v300 = vshrl.u32 %v299, 7
      %v301 = vsub.s32 %v298, %v300
      %v302 = vrot.slane %v295, %v301
      %303 = vrot.lane.b32.xlu0 %v302, 16
      %v304 = vpop.permute.xlu0 %303
      %vm306 = vcmask 287937
      %307 = vst.msk [vmem:[#allocation6] sm:$0x2] %vm306, %v304
      %v308 = vld [vmem:[%s192] sm:$0x1]
      %v310 = vcombine.low %v308, %v308
      %v312 = vunpack.c.l.s4 1935823168
      %v313 = vunpack.c.0.s8 %v312
      %v314 = vlaneseq
      %v315 = vshrl.u32 %v314, 7
      %v316 = vsub.s32 %v313, %v315
      %v317 = vrot.slane %v310, %v316
      %v319 = vunpack.c.l.s4 1935823168
      %v320 = vunpack.c.0.s8 %v319
      %v321 = vlaneseq
      %v322 = vshrl.u32 %v321, 7
      %v323 = vsub.s32 %v320, %v322
      %v324 = vrot.slane %v317, %v323
      %325 = vrot.lane.b32.xlu0 %v324, 112
      %v326 = vpop.permute.xlu0 %325
      %vm328 = vcmask 92162
      %329 = vst.msk [vmem:[#allocation6] sm:$0x4] %vm328, %v326
      %v330 = vld [vmem:[%s197] sm:$0x1]
      %v332 = vcombine.low %v330, %v330
      %v334 = vunpack.c.l.s4 1935823168
      %v335 = vunpack.c.0.s8 %v334
      %v336 = vlaneseq
      %v337 = vshrl.u32 %v336, 7
      %v338 = vsub.s32 %v335, %v337
      %v339 = vrot.slane %v332, %v338
      %v341 = vunpack.c.l.s4 1935823168
      %v342 = vunpack.c.0.s8 %v341
      %v343 = vlaneseq
      %v344 = vshrl.u32 %v343, 7
      %v345 = vsub.s32 %v342, %v344
      %v346 = vrot.slane %v339, %v345
      %347 = vrot.lane.b32.xlu0 %v346, 124
      %v348 = vpop.permute.xlu0 %347
      %vm350 = vcmask 190562
      %351 = vst.msk [vmem:[#allocation6] sm:$0x4] %vm350, %v348
      %v352 = vld [vmem:[%s220] sm:$0x1]
      %v354 = vcombine.low %v352, %v352
      %v356 = vunpack.c.l.s4 1935823168
      %v357 = vunpack.c.0.s8 %v356
      %v358 = vlaneseq
      %v359 = vshrl.u32 %v358, 7
      %v360 = vsub.s32 %v357, %v359
      %v361 = vrot.slane %v354, %v360
      %v363 = vunpack.c.l.s4 1935823168
      %v364 = vunpack.c.0.s8 %v363
      %v365 = vlaneseq
      %v366 = vshrl.u32 %v365, 7
      %v367 = vsub.s32 %v364, %v366
      %v368 = vrot.slane %v361, %v367
      %369 = vrot.lane.b32.xlu0 %v368, 8
      %v370 = vpop.permute.xlu0 %369
      %vm372 = vcmask 288962
      %373 = vst.msk [vmem:[#allocation6] sm:$0x4] %vm372, %v370
      %v374 = vld [vmem:[%s192] sm:$0x1]
      %v376 = vcombine.low %v374, %v374
      %v378 = vunpack.c.l.s4 1935823168
      %v379 = vunpack.c.0.s8 %v378
      %v380 = vlaneseq
      %v381 = vshrl.u32 %v380, 7
      %v382 = vsub.s32 %v379, %v381
      %v383 = vrot.slane %v376, %v382
      %v384 = vcombine.low %v383, %v383
      %v386 = vunpack.c.l.s4 1935823168
      %v387 = vunpack.c.0.s8 %v386
      %v388 = vlaneseq
      %v389 = vshrl.u32 %v388, 7
      %v390 = vsub.s32 %v387, %v389
      %v391 = vrot.slane %v384, %v390
      %392 = vrot.lane.b32.xlu0 %v391, 104
      %v393 = vpop.permute.xlu0 %392
      %vm395 = vcmask 93187
      %396 = vst.msk [vmem:[#allocation6] sm:$0x8] %vm395, %v393
      %v397 = vld [vmem:[%s197] sm:$0x1]
      %v399 = vcombine.low %v397, %v397
      %v401 = vunpack.c.l.s4 1935823168
      %v402 = vunpack.c.0.s8 %v401
      %v403 = vlaneseq
      %v404 = vshrl.u32 %v403, 7
      %v405 = vsub.s32 %v402, %v404
      %v406 = vrot.slane %v399, %v405
      %v407 = vcombine.low %v406, %v406
      %v409 = vunpack.c.l.s4 1935823168
      %v410 = vunpack.c.0.s8 %v409
      %v411 = vlaneseq
      %v412 = vshrl.u32 %v411, 7
      %v413 = vsub.s32 %v410, %v412
      %v414 = vrot.slane %v407, %v413
      %415 = vrot.lane.b32.xlu0 %v414, 116
      %v416 = vpop.permute.xlu0 %415
      %vm418 = vcmask 191587
      %419 = vst.msk [vmem:[#allocation6] sm:$0x8] %vm418, %v416
      %v420 = vld [vmem:[%s220] sm:$0x1]
      %v422 = vcombine.low %v420, %v420
      %v424 = vunpack.c.l.s4 1935823168
      %v425 = vunpack.c.0.s8 %v424
      %v426 = vlaneseq
      %v427 = vshrl.u32 %v426, 7
      %v428 = vsub.s32 %v425, %v427
      %v429 = vrot.slane %v422, %v428
      %v430 = vcombine.low %v429, %v429
      %v432 = vunpack.c.l.s4 1935823168
      %v433 = vunpack.c.0.s8 %v432
      %v434 = vlaneseq
      %v435 = vshrl.u32 %v434, 7
      %v436 = vsub.s32 %v433, %v435
      %v437 = vrot.slane %v430, %v436
      %vm439 = vcmask 289987
      %440 = vst.msk [vmem:[#allocation6] sm:$0x8] %vm439, %v437
      %v441 = vld [vmem:[%s192] sm:$0x1]
      %v444 = vunpack.c.l.s4 1935823168
      %v445 = vunpack.c.0.s8 %v444
      %v446 = vlaneseq
      %v447 = vshrl.u32 %v446, 7
      %v448 = vsub.s32 %v445, %v447
      %v449 = vrot.slane %v441, %v448
      %v451 = vunpack.c.l.s4 1935823168
      %v452 = vunpack.c.0.s8 %v451
      %v453 = vlaneseq
      %v454 = vshrl.u32 %v453, 7
      %v455 = vsub.s32 %v452, %v454
      %v456 = vrot.slane %v449, %v455
      %457 = vrot.lane.b32.xlu0 %v456, 96
      %v458 = vpop.permute.xlu0 %457
      %460 = vst.msk [vmem:[#allocation6 + $0x4] sm:$0x1] %vm194, %v458
      %v461 = vld [vmem:[%s197] sm:$0x1]
      %v464 = vunpack.c.l.s4 1935823168
      %v465 = vunpack.c.0.s8 %v464
      %v466 = vlaneseq
      %v467 = vshrl.u32 %v466, 7
      %v468 = vsub.s32 %v465, %v467
      %v469 = vrot.slane %v461, %v468
      %v471 = vunpack.c.l.s4 1935823168
      %v472 = vunpack.c.0.s8 %v471
      %v473 = vlaneseq
      %v474 = vshrl.u32 %v473, 7
      %v475 = vsub.s32 %v472, %v474
      %v476 = vrot.slane %v469, %v475
      %477 = vrot.lane.b32.xlu0 %v476, 108
      %v478 = vpop.permute.xlu0 %477
      %480 = vst.msk [vmem:[#allocation6 + $0x4] sm:$0x1] %vm217, %v478
      %v481 = vld [vmem:[%s220] sm:$0x1]
      %v484 = vunpack.c.l.s4 1935823168
      %v485 = vunpack.c.0.s8 %v484
      %v486 = vlaneseq
      %v487 = vshrl.u32 %v486, 7
      %v488 = vsub.s32 %v485, %v487
      %v489 = vrot.slane %v481, %v488
      %v491 = vunpack.c.l.s4 1935823168
      %v492 = vunpack.c.0.s8 %v491
      %v493 = vlaneseq
      %v494 = vshrl.u32 %v493, 7
      %v495 = vsub.s32 %v492, %v494
      %v496 = vrot.slane %v489, %v495
      %497 = vrot.lane.b32.xlu0 %v496, 120
      %v498 = vpop.permute.xlu0 %497
      %500 = vst.msk [vmem:[#allocation6 + $0x4] sm:$0x1] %vm240, %v498
      %v501 = vld [vmem:[%s192] sm:$0x1]
      %v504 = vunpack.c.l.s4 1935823168
      %v505 = vunpack.c.0.s8 %v504
      %v506 = vlaneseq
      %v507 = vshrl.u32 %v506, 7
      %v508 = vsub.s32 %v505, %v507
      %v509 = vrot.slane %v501, %v508
      %v510 = vcombine.low %v509, %v509
      %v512 = vunpack.c.l.s4 1935823168
      %v513 = vunpack.c.0.s8 %v512
      %v514 = vlaneseq
      %v515 = vshrl.u32 %v514, 7
      %v516 = vsub.s32 %v513, %v515
      %v517 = vrot.slane %v510, %v516
      %518 = vrot.lane.b32.xlu0 %v517, 88
      %v519 = vpop.permute.xlu0 %518
      %521 = vst.msk [vmem:[#allocation6 + $0x4] sm:$0x2] %vm262, %v519
      %v522 = vld [vmem:[%s197] sm:$0x1]
      %v525 = vunpack.c.l.s4 1935823168
      %v526 = vunpack.c.0.s8 %v525
      %v527 = vlaneseq
      %v528 = vshrl.u32 %v527, 7
      %v529 = vsub.s32 %v526, %v528
      %v530 = vrot.slane %v522, %v529
      %v531 = vcombine.low %v530, %v530
      %v533 = vunpack.c.l.s4 1935823168
      %v534 = vunpack.c.0.s8 %v533
      %v535 = vlaneseq
      %v536 = vshrl.u32 %v535, 7
      %v537 = vsub.s32 %v534, %v536
      %v538 = vrot.slane %v531, %v537
      %539 = vrot.lane.b32.xlu0 %v538, 100
      %v540 = vpop.permute.xlu0 %539
      %542 = vst.msk [vmem:[#allocation6 + $0x4] sm:$0x2] %vm284, %v540
      %v543 = vld [vmem:[%s220] sm:$0x1]
      %v546 = vunpack.c.l.s4 1935823168
      %v547 = vunpack.c.0.s8 %v546
      %v548 = vlaneseq
      %v549 = vshrl.u32 %v548, 7
      %v550 = vsub.s32 %v547, %v549
      %v551 = vrot.slane %v543, %v550
      %v552 = vcombine.low %v551, %v551
      %v554 = vunpack.c.l.s4 1935823168
      %v555 = vunpack.c.0.s8 %v554
      %v556 = vlaneseq
      %v557 = vshrl.u32 %v556, 7
      %v558 = vsub.s32 %v555, %v557
      %v559 = vrot.slane %v552, %v558
      %560 = vrot.lane.b32.xlu0 %v559, 112
      %v561 = vpop.permute.xlu0 %560
      %563 = vst.msk [vmem:[#allocation6 + $0x4] sm:$0x2] %vm306, %v561
      %v564 = vld [vmem:[%s192] sm:$0x1]
      %v566 = vcombine.low %v564, %v564
      %v568 = vunpack.c.l.s4 1935823168
      %v569 = vunpack.c.0.s8 %v568
      %v570 = vlaneseq
      %v571 = vshrl.u32 %v570, 7
      %v572 = vsub.s32 %v569, %v571
      %v573 = vrot.slane %v566, %v572
      %v575 = vunpack.c.l.s4 1935823168
      %v576 = vunpack.c.0.s8 %v575
      %v577 = vlaneseq
      %v578 = vshrl.u32 %v577, 7
      %v579 = vsub.s32 %v576, %v578
      %v580 = vrot.slane %v573, %v579
      %581 = vrot.lane.b32.xlu0 %v580, 80
      %v582 = vpop.permute.xlu0 %581
      %584 = vst.msk [vmem:[#allocation6 + $0x4] sm:$0x4] %vm328, %v582
      %v585 = vld [vmem:[%s197] sm:$0x1]
      %v587 = vcombine.low %v585, %v585
      %v589 = vunpack.c.l.s4 1935823168
      %v590 = vunpack.c.0.s8 %v589
      %v591 = vlaneseq
      %v592 = vshrl.u32 %v591, 7
      %v593 = vsub.s32 %v590, %v592
      %v594 = vrot.slane %v587, %v593
      %v596 = vunpack.c.l.s4 1935823168
      %v597 = vunpack.c.0.s8 %v596
      %v598 = vlaneseq
      %v599 = vshrl.u32 %v598, 7
      %v600 = vsub.s32 %v597, %v599
      %v601 = vrot.slane %v594, %v600
      %602 = vrot.lane.b32.xlu0 %v601, 92
      %v603 = vpop.permute.xlu0 %602
      %605 = vst.msk [vmem:[#allocation6 + $0x4] sm:$0x4] %vm350, %v603
      %v606 = vld [vmem:[%s220] sm:$0x1]
      %v608 = vcombine.low %v606, %v606
      %v610 = vunpack.c.l.s4 1935823168
      %v611 = vunpack.c.0.s8 %v610
      %v612 = vlaneseq
      %v613 = vshrl.u32 %v612, 7
      %v614 = vsub.s32 %v611, %v613
      %v615 = vrot.slane %v608, %v614
      %v617 = vunpack.c.l.s4 1935823168
      %v618 = vunpack.c.0.s8 %v617
      %v619 = vlaneseq
      %v620 = vshrl.u32 %v619, 7
      %v621 = vsub.s32 %v618, %v620
      %v622 = vrot.slane %v615, %v621
      %623 = vrot.lane.b32.xlu0 %v622, 104
      %v624 = vpop.permute.xlu0 %623
      %626 = vst.msk [vmem:[#allocation6 + $0x4] sm:$0x4] %vm372, %v624
      %v627 = vld [vmem:[#allocation6] sm:$0xf]
      %v628 = vld [vmem:[#allocation6 + $0x4] sm:$0x7]
      %v629 = vld [vmem:[%s1] sm:$0xf]
      %v630 = vld [vmem:[%s1 + $0x4] sm:$0xf]
      %v631 = vld [vmem:[%s1 + $0x8] sm:$0xf]
      %v632 = vld [vmem:[%s1 + $0xc] sm:$0xf]
      %v633 = vld [vmem:[%s1 + $0x10] sm:$0x3]
      %v634 = vld [vmem:[%s2] sm:$0x1]
      %v636 = vlaneseq
      %v637 = vshrl.u32 %v636, 7
      %v638 = vsub.s32 0, %v637
      %v639 = vrot.slane %v634, %v638
      %v643 = vunpack.c.l.b16 %v627
      %v644 = vunpack.c.l.b16 %v628
      %v645 = vpack.c.b16 %v644, %v643
      %v651 = vunpack.c.l.b16 %v629
      %v652 = vunpack.c.l.b16 %v630
      %v653 = vunpack.c.l.b16 %v631
      %v654 = vunpack.c.l.b16 %v632
      %v655 = vunpack.c.l.b16 %v633
      %v656 = vpack.c.b16 %v652, %v651
      %v657 = vpack.c.b16 %v654, %v653
      %v658 = vpack.c.b16 %v655, %v655
      %vm661 = vcmask 293888
      %v663 = vsel %vm661, %v645, 0
      %vm665 = vcmask 1041408
      %v667 = vsel %vm665, %v658, 0
      %669 = vmatprep.subr.bf16.mxu0 0
      %670 = vmatpush1.bf16.msra.mxu0 %v656
      %671 = vmatprep.subr.bf16.mxu0 0
      %672 = vmatpush1.bf16.msra.mxu0 %v657
      %673 = vmatprep.subr.bf16.mxu0 0
      %674 = vmatpush1.bf16.msra.mxu0 %v667
      %675 = vmatprep.subr.bf16.mxu0 0
      %676 = vmatpush1.bf16.msra.mxu0 0
      %677 = vmatprep.subr.bf16.mxu0 0
      %678 = vmatpush1.bf16.msra.mxu0 0
      %679 = vmatprep.subr.bf16.mxu0 0
      %680 = vmatpush1.bf16.msra.mxu0 0
      %681 = vmatprep.subr.bf16.mxu0 0
      %682 = vmatpush1.bf16.msra.mxu0 0
      %683 = vmatprep.subr.bf16.mxu0 0
      %684 = vmatpush1.bf16.msra.mxu0 0
      %685 = vmatprep.subr.bf16.mxu0 0
      %686 = vmatpush1.bf16.msra.mxu0 0
      %687 = vmatprep.subr.bf16.mxu0 0
      %688 = vmatpush1.bf16.msra.mxu0 0
      %689 = vmatprep.subr.bf16.mxu0 0
      %690 = vmatpush1.bf16.msra.mxu0 0
      %691 = vmatprep.subr.bf16.mxu0 0
      %692 = vmatpush1.bf16.msra.mxu0 0
      %693 = vmatprep.subr.bf16.mxu0 0
      %694 = vmatpush1.bf16.msra.mxu0 0
      %695 = vmatprep.subr.bf16.mxu0 0
      %696 = vmatpush1.bf16.msra.mxu0 0
      %697 = vmatprep.subr.bf16.mxu0 0
      %698 = vmatpush1.bf16.msra.mxu0 0
      %699 = vmatprep.subr.bf16.mxu0 0
      %700 = vmatpush1.bf16.msra.mxu0 0
      %701 = vmatprep.mubr.bf16.mxu0 0
      %702 = vmatmul.mubr.bf16.gmra.mrb[0].mxu0 %v663
      %v703 = vpop.f32.mrb[0].mxu0
      %v704 = vadd.f32 %v639, %v703
      %v705 = vpop.f32.mrb[0].mxu0
      %v706 = vpop.f32.mrb[0].mxu0
      %v707 = vadd.f32 %v639, %v706
      %v708 = vpop.f32.mrb[0].mxu0
      %709 = vdwg.mxu0
      %v710 = vmax.f32 %v704, 0.0
      %v711 = vmax.f32 %v707, 0.0
      %v712 = vpack.c.bf16 %v711, %v710
      %s713 = scalar_lea.vmem [#allocation3], %s191
      %vm714 = vcmask 253952
      %715 = vst.msk [vmem:[%s713] sm:$0x1] %vm714, %v712
      %v718 = vunpack.c.l.s4 1966171168
      %v719 = vunpack.c.0.s8 %v718
      %v720 = vlaneseq
      %v721 = vshrl.u32 %v720, 7
      %v722 = vsub.s32 %v719, %v721
      %v723 = vrot.slane %v712, %v722
      %v724 = vcombine.high %v723, %v723
      %v726 = vunpack.c.l.s4 1966171168
      %v727 = vunpack.c.0.s8 %v726
      %v728 = vlaneseq
      %v729 = vshrl.u32 %v728, 7
      %v730 = vsub.s32 %v727, %v729
      %v731 = vrot.slane %v723, %v730
      %v733 = vunpack.c.l.s4 1966171168
      %v734 = vunpack.c.0.s8 %v733
      %v735 = vlaneseq
      %v736 = vshrl.u32 %v735, 7
      %v737 = vsub.s32 %v734, %v736
      %v738 = vrot.slane %v724, %v737
      %739 = vrot.lane.b32.xlu0 %v738, 32
      %v740 = vpop.permute.xlu0 %739
      %vm742 = vcmask 516352
      %743 = vst.msk [vmem:[%s713] sm:$0x1] %vm742, %v740
      %v744 = vcombine.high %v731, %v731
      %745 = vrot.lane.b32.xlu0 %v744, 64
      %v746 = vpop.permute.xlu0 %745
      %vm748 = vcmask 778752
      %749 = vst.msk [vmem:[%s713] sm:$0x1] %vm748, %v746
      %v750 = vcombine.high %v738, %v738
      %751 = vrot.lane.b32.xlu0 %v750, 96
      %v752 = vpop.permute.xlu0 %751
      %vm754 = vcmask 1041152
      %755 = vst.msk [vmem:[%s713] sm:$0x1] %vm754, %v752
      %v756 = vcombine.high %v712, %v712
      %v758 = vunpack.c.l.s4 1966171168
      %v759 = vunpack.c.0.s8 %v758
      %v760 = vlaneseq
      %v761 = vshrl.u32 %v760, 7
      %v762 = vsub.s32 %v759, %v761
      %v763 = vrot.slane %v756, %v762
      %v765 = vunpack.c.l.s4 1966171168
      %v766 = vunpack.c.0.s8 %v765
      %v767 = vlaneseq
      %v768 = vshrl.u32 %v767, 7
      %v769 = vsub.s32 %v766, %v768
      %v770 = vrot.slane %v763, %v769
      %772 = vst.msk [vmem:[%s713 + $0x1] sm:$0x1] %vm714, %v770
      %v773 = vcombine.high %v763, %v763
      %v775 = vunpack.c.l.s4 1966171168
      %v776 = vunpack.c.0.s8 %v775
      %v777 = vlaneseq
      %v778 = vshrl.u32 %v777, 7
      %v779 = vsub.s32 %v776, %v778
      %v780 = vrot.slane %v773, %v779
      %781 = vrot.lane.b32.xlu0 %v780, 32
      %v782 = vpop.permute.xlu0 %781
      %784 = vst.msk [vmem:[%s713 + $0x1] sm:$0x1] %vm742, %v782
      %v785 = vcombine.high %v770, %v770
      %786 = vrot.lane.b32.xlu0 %v785, 64
      %v787 = vpop.permute.xlu0 %786
      %789 = vst.msk [vmem:[%s713 + $0x1] sm:$0x1] %vm748, %v787
    $region50: #{_net_forward.1} parent=1 // loop_footer
      %s190 = sadd.s32 1, %s186
    $region51: #{_net_forward.1} parent=1 // loop_footer_branch
      %185 = sbr.rel target = $region47
    $region52: #{_net_forward.1} parent=1 // loop_exit
      _
    loop: start=0, step=1, limit=3
    $region53: #{_net_forward.1} parent=1 // loop_pre_header
      _
    $region54: #{_net_forward.1} parent=1 // loop_header
      %s791 = sphi 0, %s795
      %p792 = scmp.ge.s32.totalorder %s791, 3
    $region55: #{_net_forward.1} parent=1 // loop_header_branch
      %794 = sbr.rel (%p792) target = $region59
    $region56: #{_net_forward.1} parent=1 // loop_body
      %s796 = smul.u32 %s791, 2
      %s797 = smul.u32 %s796, 2
      %s798 = scalar_lea.vmem [#allocation3], %s797
      %v799 = vld [vmem:[%s798] sm:$0x1]
      %vm800 = vcmask 778240
      %801 = vst.msk [vmem:[#allocation7] sm:$0x1] %vm800, %v799
      %s802 = sadd.s32 %s796, 1
      %s803 = smul.u32 %s802, 2
      %s804 = scalar_lea.vmem [#allocation3], %s803
      %v805 = vld [vmem:[%s804] sm:$0x1]
      %v808 = vunpack.c.l.s4 1935823168
      %v809 = vunpack.c.0.s8 %v808
      %v810 = vlaneseq
      %v811 = vshrl.u32 %v810, 7
      %v812 = vsub.s32 %v809, %v811
      %v813 = vrot.slane %v805, %v812
      %v815 = vunpack.c.l.s4 1935823168
      %v816 = vunpack.c.0.s8 %v815
      %v817 = vlaneseq
      %v818 = vshrl.u32 %v817, 7
      %v819 = vsub.s32 %v816, %v818
      %v820 = vrot.slane %v813, %v819
      %821 = vrot.lane.b32.xlu0 %v820, 96
      %v822 = vpop.permute.xlu0 %821
      %v823 = vrot.slane %v822, 4
      %vm824 = vcmask 785408
      %v825 = vsel %vm824, %v823, %v822
      %vm827 = vcmask 1041152
      %vm828 = vcmask 520196
      %vm829 = vmor %vm828, %vm827
      %830 = vst.msk [vmem:[#allocation7] sm:$0x11] %vm829, %v825
      %s831 = sadd.s32 %s796, 2
      %s832 = smul.u32 %s831, 2
      %s833 = scalar_lea.vmem [#allocation3], %s832
      %v834 = vld [vmem:[%s833] sm:$0x1]
      %v837 = vunpack.c.l.s4 1935823168
      %v838 = vunpack.c.0.s8 %v837
      %v839 = vlaneseq
      %v840 = vshrl.u32 %v839, 7
      %v841 = vsub.s32 %v838, %v840
      %v842 = vrot.slane %v834, %v841
      %v844 = vunpack.c.l.s4 1935823168
      %v845 = vunpack.c.0.s8 %v844
      %v846 = vlaneseq
      %v847 = vshrl.u32 %v846, 7
      %v848 = vsub.s32 %v845, %v847
      %v849 = vrot.slane %v842, %v848
      %850 = vrot.lane.b32.xlu0 %v849, 64
      %v851 = vpop.permute.xlu0 %850
      %v852 = vrot.slane %v851, 4
      %vm853 = vcmask 523264
      %v854 = vsel %vm853, %v852, %v851
      %vm856 = vcmask 1040896
      %vm857 = vcmask 258052
      %vm858 = vmor %vm857, %vm856
      %859 = vst.msk [vmem:[#allocation7 + $0x4] sm:$0x11] %vm858, %v854
      %v860 = vld [vmem:[%s798] sm:$0x3]
      %v863 = vunpack.c.l.s4 1935823168
      %v864 = vunpack.c.0.s8 %v863
      %v865 = vlaneseq
      %v866 = vshrl.u32 %v865, 7
      %v867 = vsub.s32 %v864, %v866
      %v868 = vrot.slane %v860, %v867
      %v869 = vcombine.low %v868, %v868
      %v871 = vunpack.c.l.s4 1935823168
      %v872 = vunpack.c.0.s8 %v871
      %v873 = vlaneseq
      %v874 = vshrl.u32 %v873, 7
      %v875 = vsub.s32 %v872, %v874
      %v876 = vrot.slane %v869, %v875
      %877 = vrot.lane.b32.xlu0 %v876, 64
      %v878 = vpop.permute.xlu0 %877
      %v879 = vrot.slane %v878, 4
      %v880 = vsel %vm853, %v878, %v879
      %vm882 = vcmask 779265
      %883 = vst.msk [vmem:[#allocation7] sm:$0x2] %vm882, %v880
      %v884 = vld [vmem:[%s804] sm:$0x3]
      %v887 = vunpack.c.l.s4 1935823168
      %v888 = vunpack.c.0.s8 %v887
      %v889 = vlaneseq
      %v890 = vshrl.u32 %v889, 7
      %v891 = vsub.s32 %v888, %v890
      %v892 = vrot.slane %v884, %v891
      %v893 = vcombine.low %v892, %v892
      %v895 = vunpack.c.l.s4 1935823168
      %v896 = vunpack.c.0.s8 %v895
      %v897 = vlaneseq
      %v898 = vshrl.u32 %v897, 7
      %v899 = vsub.s32 %v896, %v898
      %v900 = vrot.slane %v893, %v899
      %901 = vrot.lane.b32.xlu0 %v900, 32
      %v902 = vpop.permute.xlu0 %901
      %v903 = vrot.slane %v902, 4
      %vm904 = vcmask 261120
      %v905 = vsel %vm904, %v903, %v902
      %vm907 = vcmask 1042177
      %vm908 = vcmask 521221
      %vm909 = vmor %vm908, %vm907
      %910 = vst.msk [vmem:[#allocation7] sm:$0x22] %vm909, %v905
      %v911 = vld [vmem:[%s833] sm:$0x3]
      %v914 = vunpack.c.l.s4 1935823168
      %v915 = vunpack.c.0.s8 %v914
      %v916 = vlaneseq
      %v917 = vshrl.u32 %v916, 7
      %v918 = vsub.s32 %v915, %v917
      %v919 = vrot.slane %v911, %v918
      %v920 = vcombine.low %v919, %v919
      %v922 = vunpack.c.l.s4 1935823168
      %v923 = vunpack.c.0.s8 %v922
      %v924 = vlaneseq
      %v925 = vshrl.u32 %v924, 7
      %v926 = vsub.s32 %v923, %v925
      %v927 = vrot.slane %v920, %v926
      %vm929 = vcmask 1041921
      %vm930 = vcmask 259077
      %vm931 = vmor %vm930, %vm929
      %932 = vst.msk [vmem:[#allocation7 + $0x4] sm:$0x22] %vm931, %v927
      %v933 = vld [vmem:[%s798 + $0x1] sm:$0x1]
      %v935 = vcombine.low %v933, %v933
      %v937 = vunpack.c.l.s4 1935823168
      %v938 = vunpack.c.0.s8 %v937
      %v939 = vlaneseq
      %v940 = vshrl.u32 %v939, 7
      %v941 = vsub.s32 %v938, %v940
      %v942 = vrot.slane %v935, %v941
      %v944 = vunpack.c.l.s4 1935823168
      %v945 = vunpack.c.0.s8 %v944
      %v946 = vlaneseq
      %v947 = vshrl.u32 %v946, 7
      %v948 = vsub.s32 %v945, %v947
      %v949 = vrot.slane %v942, %v948
      %vm951 = vcmask 780290
      %952 = vst.msk [vmem:[#allocation7] sm:$0x4] %vm951, %v949
      %v953 = vld [vmem:[%s804 + $0x1] sm:$0x1]
      %v955 = vcombine.low %v953, %v953
      %v957 = vunpack.c.l.s4 1935823168
      %v958 = vunpack.c.0.s8 %v957
      %v959 = vlaneseq
      %v960 = vshrl.u32 %v959, 7
      %v961 = vsub.s32 %v958, %v960
      %v962 = vrot.slane %v955, %v961
      %v964 = vunpack.c.l.s4 1935823168
      %v965 = vunpack.c.0.s8 %v964
      %v966 = vlaneseq
      %v967 = vshrl.u32 %v966, 7
      %v968 = vsub.s32 %v965, %v967
      %v969 = vrot.slane %v962, %v968
      %970 = vrot.lane.b32.xlu0 %v969, 96
      %v971 = vpop.permute.xlu0 %970
      %v972 = vrot.slane %v971, 4
      %v973 = vsel %vm824, %v972, %v971
      %vm975 = vcmask 1043202
      %vm976 = vcmask 522246
      %vm977 = vmor %vm976, %vm975
      %978 = vst.msk [vmem:[#allocation7] sm:$0x44] %vm977, %v973
      %v979 = vld [vmem:[%s833 + $0x1] sm:$0x1]
      %v981 = vcombine.low %v979, %v979
      %v983 = vunpack.c.l.s4 1935823168
      %v984 = vunpack.c.0.s8 %v983
      %v985 = vlaneseq
      %v986 = vshrl.u32 %v985, 7
      %v987 = vsub.s32 %v984, %v986
      %v988 = vrot.slane %v981, %v987
      %v990 = vunpack.c.l.s4 1935823168
      %v991 = vunpack.c.0.s8 %v990
      %v992 = vlaneseq
      %v993 = vshrl.u32 %v992, 7
      %v994 = vsub.s32 %v991, %v993
      %v995 = vrot.slane %v988, %v994
      %996 = vrot.lane.b32.xlu0 %v995, 64
      %v997 = vpop.permute.xlu0 %996
      %v998 = vrot.slane %v997, 4
      %v999 = vsel %vm853, %v998, %v997
      %vm1001 = vcmask 1042946
      %vm1002 = vcmask 260102
      %vm1003 = vmor %vm1002, %vm1001
      %1004 = vst.msk [vmem:[#allocation7 + $0x4] sm:$0x44] %vm1003, %v999
      %v1005 = vld [vmem:[#allocation7] sm:$0x77]
      %v1006 = vld [vmem:[#allocation7 + $0x8] sm:$0x7]
      %v1007 = vld [vmem:[%s3] sm:$0xf]
      %v1008 = vld [vmem:[%s3 + $0x4] sm:$0xf]
      %v1009 = vld [vmem:[%s3 + $0x8] sm:$0xf]
      %v1010 = vld [vmem:[%s3 + $0xc] sm:$0xf]
      %v1011 = vld [vmem:[%s3 + $0x10] sm:$0xf]
      %v1012 = vld [vmem:[%s3 + $0x14] sm:$0xf]
      %v1013 = vld [vmem:[%s3 + $0x18] sm:$0xf]
      %v1014 = vld [vmem:[%s3 + $0x1c] sm:$0xf]
      %v1015 = vld [vmem:[%s3 + $0x20] sm:$0xf]
      %v1016 = vld [vmem:[%s3 + $0x24] sm:$0xf]
      %v1017 = vld [vmem:[%s3 + $0x28] sm:$0xf]
      %v1018 = vld [vmem:[%s3 + $0x2c] sm:$0xf]
      %v1019 = vld [vmem:[%s3 + $0x30] sm:$0xf]
      %v1020 = vld [vmem:[%s3 + $0x34] sm:$0xf]
      %v1021 = vld [vmem:[%s3 + $0x38] sm:$0xf]
      %v1022 = vld [vmem:[%s3 + $0x3c] sm:$0xf]
      %v1023 = vld [vmem:[%s3 + $0x40] sm:$0xf]
      %v1024 = vld [vmem:[%s3 + $0x44] sm:$0xf]
      %v1025 = vld [vmem:[%s3 + $0x48] sm:$0xf]
      %v1026 = vld [vmem:[%s3 + $0x4c] sm:$0xf]
      %v1027 = vld [vmem:[%s3 + $0x50] sm:$0xf]
      %v1028 = vld [vmem:[%s3 + $0x54] sm:$0xf]
      %v1029 = vld [vmem:[%s3 + $0x58] sm:$0xf]
      %v1030 = vld [vmem:[%s3 + $0x5c] sm:$0xf]
      %v1031 = vld [vmem:[%s3 + $0x60] sm:$0xf]
      %v1032 = vld [vmem:[%s3 + $0x64] sm:$0xf]
      %v1033 = vld [vmem:[%s3 + $0x68] sm:$0xf]
      %v1034 = vld [vmem:[%s3 + $0x6c] sm:$0xf]
      %v1035 = vld [vmem:[%s3 + $0x70] sm:$0xf]
      %v1036 = vld [vmem:[%s3 + $0x74] sm:$0xf]
      %v1037 = vld [vmem:[%s3 + $0x78] sm:$0xf]
      %v1038 = vld [vmem:[%s3 + $0x7c] sm:$0xf]
      %v1039 = vld [vmem:[%s3 + $0x80] sm:$0xf]
      %v1040 = vld [vmem:[%s3 + $0x84] sm:$0xf]
      %v1041 = vld [vmem:[%s3 + $0x88] sm:$0xf]
      %v1042 = vld [vmem:[%s3 + $0x8c] sm:$0xf]
      %v1043 = vld [vmem:[%s4] sm:$0x1]
      %v1045 = vlaneseq
      %v1046 = vshrl.u32 %v1045, 7
      %v1047 = vsub.s32 0, %v1046
      %v1048 = vrot.slane %v1043, %v1047
      %v1052 = vunpack.c.l.b16 %v1005
      %v1053 = vunpack.c.h.b16 %v1005
      %v1054 = vunpack.c.l.b16 %v1006
      %v1055 = vpack.c.b16 %v1052, %v1052
      %v1056 = vpack.c.b16 %v1053, %v1053
      %v1057 = vpack.c.b16 %v1054, %v1054
      %v1096 = vunpack.c.l.b16 %v1007
      %v1097 = vunpack.c.l.b16 %v1008
      %v1098 = vunpack.c.l.b16 %v1009
      %v1099 = vunpack.c.l.b16 %v1010
      %v1100 = vunpack.c.l.b16 %v1011
      %v1101 = vunpack.c.l.b16 %v1012
      %v1102 = vunpack.c.l.b16 %v1013
      %v1103 = vunpack.c.l.b16 %v1014
      %v1104 = vunpack.c.l.b16 %v1015
      %v1105 = vunpack.c.l.b16 %v1016
      %v1106 = vunpack.c.l.b16 %v1017
      %v1107 = vunpack.c.l.b16 %v1018
      %v1108 = vunpack.c.l.b16 %v1019
      %v1109 = vunpack.c.l.b16 %v1020
      %v1110 = vunpack.c.l.b16 %v1021
      %v1111 = vunpack.c.l.b16 %v1022
      %v1112 = vunpack.c.l.b16 %v1023
      %v1113 = vunpack.c.l.b16 %v1024
      %v1114 = vunpack.c.l.b16 %v1025
      %v1115 = vunpack.c.l.b16 %v1026
      %v1116 = vunpack.c.l.b16 %v1027
      %v1117 = vunpack.c.l.b16 %v1028
      %v1118 = vunpack.c.l.b16 %v1029
      %v1119 = vunpack.c.l.b16 %v1030
      %v1120 = vunpack.c.l.b16 %v1031
      %v1121 = vunpack.c.l.b16 %v1032
      %v1122 = vunpack.c.l.b16 %v1033
      %v1123 = vunpack.c.l.b16 %v1034
      %v1124 = vunpack.c.l.b16 %v1035
      %v1125 = vunpack.c.l.b16 %v1036
      %v1126 = vunpack.c.l.b16 %v1037
      %v1127 = vunpack.c.l.b16 %v1038
      %v1128 = vunpack.c.l.b16 %v1039
      %v1129 = vunpack.c.l.b16 %v1040
      %v1130 = vunpack.c.l.b16 %v1041
      %v1131 = vunpack.c.l.b16 %v1042
      %v1132 = vpack.c.b16 %v1097, %v1096
      %v1133 = vpack.c.b16 %v1099, %v1098
      %v1134 = vpack.c.b16 %v1101, %v1100
      %v1135 = vpack.c.b16 %v1103, %v1102
      %v1136 = vpack.c.b16 %v1105, %v1104
      %v1137 = vpack.c.b16 %v1107, %v1106
      %v1138 = vpack.c.b16 %v1109, %v1108
      %v1139 = vpack.c.b16 %v1111, %v1110
      %v1140 = vpack.c.b16 %v1113, %v1112
      %v1141 = vpack.c.b16 %v1115, %v1114
      %v1142 = vpack.c.b16 %v1117, %v1116
      %v1143 = vpack.c.b16 %v1119, %v1118
      %v1144 = vpack.c.b16 %v1121, %v1120
      %v1145 = vpack.c.b16 %v1123, %v1122
      %v1146 = vpack.c.b16 %v1125, %v1124
      %v1147 = vpack.c.b16 %v1127, %v1126
      %v1148 = vpack.c.b16 %v1129, %v1128
      %v1149 = vpack.c.b16 %v1131, %v1130
      %vm1168 = vcmask 261120
      %v1170 = vsel %vm1168, %v1057, 0
      %1172 = vmatprep.subr.bf16.mxu0 0
      %1173 = vmatpush1.bf16.msra.mxu0 %v1132
      %1174 = vmatprep.subr.bf16.mxu0 0
      %1175 = vmatpush1.bf16.msra.mxu0 %v1133
      %1176 = vmatprep.subr.bf16.mxu0 0
      %1177 = vmatpush1.bf16.msra.mxu0 %v1134
      %1178 = vmatprep.subr.bf16.mxu0 0
      %1179 = vmatpush1.bf16.msra.mxu0 %v1135
      %1180 = vmatprep.subr.bf16.mxu0 0
      %1181 = vmatpush1.bf16.msra.mxu0 %v1136
      %1182 = vmatprep.subr.bf16.mxu0 0
      %1183 = vmatpush1.bf16.msra.mxu0 %v1137
      %1184 = vmatprep.subr.bf16.mxu0 0
      %1185 = vmatpush1.bf16.msra.mxu0 %v1138
      %1186 = vmatprep.subr.bf16.mxu0 0
      %1187 = vmatpush1.bf16.msra.mxu0 %v1139
      %1188 = vmatprep.subr.bf16.mxu0 0
      %1189 = vmatpush1.bf16.msra.mxu0 %v1140
      %1190 = vmatprep.subr.bf16.mxu0 0
      %1191 = vmatpush1.bf16.msra.mxu0 %v1141
      %1192 = vmatprep.subr.bf16.mxu0 0
      %1193 = vmatpush1.bf16.msra.mxu0 %v1142
      %1194 = vmatprep.subr.bf16.mxu0 0
      %1195 = vmatpush1.bf16.msra.mxu0 %v1143
      %1196 = vmatprep.subr.bf16.mxu0 0
      %1197 = vmatpush1.bf16.msra.mxu0 %v1144
      %1198 = vmatprep.subr.bf16.mxu0 0
      %1199 = vmatpush1.bf16.msra.mxu0 %v1145
      %1200 = vmatprep.subr.bf16.mxu0 0
      %1201 = vmatpush1.bf16.msra.mxu0 %v1146
      %1202 = vmatprep.subr.bf16.mxu0 0
      %1203 = vmatpush1.bf16.msra.mxu0 %v1147
      %1204 = vmatprep.mubr.bf16.mxu0 %v1056
      %1205 = vmatmul.mubr.bf16.gmra.mrb[0].mxu0 %v1055
      %v1206 = vpop.f32.mrb[0].mxu0
      %v1207 = vadd.f32 %v1048, %v1206
      %v1208 = vpop.f32.mrb[0].mxu0
      %v1209 = vpop.f32.mrb[0].mxu0
      %v1210 = vpop.f32.mrb[0].mxu0
      %1211 = vdwg.mxu0
      %1212 = vmatprep.subr.bf16.mxu0 0
      %1213 = vmatpush1.bf16.msra.mxu0 %v1148
      %1214 = vmatprep.subr.bf16.mxu0 0
      %1215 = vmatpush1.bf16.msra.mxu0 %v1149
      %1216 = vmatprep.subr.bf16.mxu0 0
      %1217 = vmatpush1.bf16.msra.mxu0 0
      %1218 = vmatprep.subr.bf16.mxu0 0
      %1219 = vmatpush1.bf16.msra.mxu0 0
      %1220 = vmatprep.subr.bf16.mxu0 0
      %1221 = vmatpush1.bf16.msra.mxu0 0
      %1222 = vmatprep.subr.bf16.mxu0 0
      %1223 = vmatpush1.bf16.msra.mxu0 0
      %1224 = vmatprep.subr.bf16.mxu0 0
      %1225 = vmatpush1.bf16.msra.mxu0 0
      %1226 = vmatprep.subr.bf16.mxu0 0
      %1227 = vmatpush1.bf16.msra.mxu0 0
      %1228 = vmatprep.subr.bf16.mxu0 0
      %1229 = vmatpush1.bf16.msra.mxu0 0
      %1230 = vmatprep.subr.bf16.mxu0 0
      %1231 = vmatpush1.bf16.msra.mxu0 0
      %1232 = vmatprep.subr.bf16.mxu0 0
      %1233 = vmatpush1.bf16.msra.mxu0 0
      %1234 = vmatprep.subr.bf16.mxu0 0
      %1235 = vmatpush1.bf16.msra.mxu0 0
      %1236 = vmatprep.subr.bf16.mxu0 0
      %1237 = vmatpush1.bf16.msra.mxu0 0
      %1238 = vmatprep.subr.bf16.mxu0 0
      %1239 = vmatpush1.bf16.msra.mxu0 0
      %1240 = vmatprep.subr.bf16.mxu0 0
      %1241 = vmatpush1.bf16.msra.mxu0 0
      %1242 = vmatprep.subr.bf16.mxu0 0
      %1243 = vmatpush1.bf16.msra.mxu0 0
      %1244 = vmatprep.mubr.bf16.mxu0 0
      %1245 = vmatmul.mubr.bf16.gmra.mrb[0].mxu0 %v1170
      %v1246 = vpop.f32.mrb[0].mxu0
      %v1247 = vadd.f32 %v1207, %v1246
      %v1248 = vpop.f32.mrb[0].mxu0
      %v1249 = vpop.f32.mrb[0].mxu0
      %v1250 = vpop.f32.mrb[0].mxu0
      %1251 = vdwg.mxu0
      %v1252 = vmax.f32 %v1247, 0.0
      %v1253 = vpack.c.bf16 %v1252, %v1252
      %s1254 = scalar_lea.vmem [#allocation4], %s791
      %vm1255 = vcmask 253952
      %1256 = vst.msk [vmem:[%s1254] sm:$0x1] %vm1255, %v1253
      %v1259 = vunpack.c.l.s4 1966171168
      %v1260 = vunpack.c.0.s8 %v1259
      %v1261 = vlaneseq
      %v1262 = vshrl.u32 %v1261, 7
      %v1263 = vsub.s32 %v1260, %v1262
      %v1264 = vrot.slane %v1253, %v1263
      %v1265 = vcombine.high %v1264, %v1264
      %v1267 = vunpack.c.l.s4 1966171168
      %v1268 = vunpack.c.0.s8 %v1267
      %v1269 = vlaneseq
      %v1270 = vshrl.u32 %v1269, 7
      %v1271 = vsub.s32 %v1268, %v1270
      %v1272 = vrot.slane %v1264, %v1271
      %v1274 = vunpack.c.l.s4 1966171168
      %v1275 = vunpack.c.0.s8 %v1274
      %v1276 = vlaneseq
      %v1277 = vshrl.u32 %v1276, 7
      %v1278 = vsub.s32 %v1275, %v1277
      %v1279 = vrot.slane %v1265, %v1278
      %1280 = vrot.lane.b32.xlu0 %v1279, 32
      %v1281 = vpop.permute.xlu0 %1280
      %vm1283 = vcmask 516352
      %1284 = vst.msk [vmem:[%s1254] sm:$0x1] %vm1283, %v1281
      %v1285 = vcombine.high %v1272, %v1272
      %1286 = vrot.lane.b32.xlu0 %v1285, 64
      %v1287 = vpop.permute.xlu0 %1286
      %vm1289 = vcmask 778752
      %1290 = vst.msk [vmem:[%s1254] sm:$0x1] %vm1289, %v1287
    $region57: #{_net_forward.1} parent=1 // loop_footer
      %s795 = sadd.s32 1, %s791
    $region58: #{_net_forward.1} parent=1 // loop_footer_branch
      %790 = sbr.rel target = $region54
    $region59: #{_net_forward.1} parent=1 // loop_exit
      _
    %v1291 = vld [vmem:[#allocation4] sm:$0x1]
    %vm1292 = vcmask 778240
    %1293 = vst.msk [vmem:[#allocation8] sm:$0x1] %vm1292, %v1291
    %s1294 = scalar_lea.vmem [#allocation4], 1
    %v1295 = vld [vmem:[%s1294] sm:$0x1]
    %1297 = vrot.lane.b32.xlu0 %v1295, 96
    %v1298 = vpop.permute.xlu0 %1297
    %v1299 = vrot.slane %v1298, 7
    %vm1300 = vcmask 785408
    %v1301 = vsel %vm1300, %v1299, %v1298
    %vm1303 = vcmask 1041152
    %vm1304 = vcmask 517121
    %vm1305 = vmor %vm1304, %vm1303
    %1306 = vst.msk [vmem:[#allocation8] sm:$0x3] %vm1305, %v1301
    %s1307 = scalar_lea.vmem [#allocation4], 2
    %v1308 = vld [vmem:[%s1307] sm:$0x1]
    %1310 = vrot.lane.b32.xlu0 %v1308, 64
    %v1311 = vpop.permute.xlu0 %1310
    %v1312 = vrot.slane %v1311, 7
    %vm1313 = vcmask 523264
    %v1314 = vsel %vm1313, %v1312, %v1311
    %vm1316 = vcmask 1040896
    %vm1317 = vcmask 254977
    %vm1318 = vmor %vm1317, %vm1316
    %1319 = vst.msk [vmem:[#allocation8 + $0x1] sm:$0x3] %vm1318, %v1314
    %v1320 = vld [vmem:[#allocation8] sm:$0x7]
    %v1321 = vld [vmem:[%s5] sm:$0xf]
    %v1322 = vld [vmem:[%s5 + $0x4] sm:$0xf]
    %v1323 = vld [vmem:[%s5 + $0x8] sm:$0xf]
    %v1324 = vld [vmem:[%s5 + $0xc] sm:$0xf]
    %v1325 = vld [vmem:[%s5 + $0x10] sm:$0xf]
    %v1326 = vld [vmem:[%s5 + $0x14] sm:$0xf]
    %v1327 = vld [vmem:[%s5 + $0x18] sm:$0xf]
    %v1328 = vld [vmem:[%s5 + $0x1c] sm:$0xf]
    %v1329 = vld [vmem:[%s5 + $0x20] sm:$0xf]
    %v1330 = vld [vmem:[%s5 + $0x24] sm:$0xf]
    %v1331 = vld [vmem:[%s5 + $0x28] sm:$0xf]
    %v1332 = vld [vmem:[%s5 + $0x2c] sm:$0xf]
    %v1333 = vld [vmem:[%s5 + $0x30] sm:$0xf]
    %v1334 = vld [vmem:[%s5 + $0x34] sm:$0xf]
    %v1335 = vld [vmem:[%s5 + $0x38] sm:$0xf]
    %v1336 = vld [vmem:[%s5 + $0x3c] sm:$0xf]
    %v1337 = vld [vmem:[%s5 + $0x40] sm:$0xf]
    %v1338 = vld [vmem:[%s5 + $0x44] sm:$0xf]
    %v1339 = vld [vmem:[%s5 + $0x48] sm:$0xf]
    %v1340 = vld [vmem:[%s5 + $0x4c] sm:$0xf]
    %v1341 = vld [vmem:[%s5 + $0x50] sm:$0xf]
    %v1342 = vld [vmem:[%s5 + $0x54] sm:$0xf]
    %v1343 = vld [vmem:[%s5 + $0x58] sm:$0xf]
    %v1344 = vld [vmem:[%s5 + $0x5c] sm:$0xf]
    %v1345 = vld [vmem:[%s5 + $0x60] sm:$0xf]
    %v1346 = vld [vmem:[%s5 + $0x64] sm:$0xf]
    %v1347 = vld [vmem:[%s5 + $0x68] sm:$0xf]
    %v1348 = vld [vmem:[%s5 + $0x6c] sm:$0xf]
    %v1349 = vld [vmem:[%s5 + $0x70] sm:$0xf]
    %v1350 = vld [vmem:[%s5 + $0x74] sm:$0xf]
    %v1351 = vld [vmem:[%s5 + $0x78] sm:$0xf]
    %v1352 = vld [vmem:[%s5 + $0x7c] sm:$0xf]
    %v1353 = vld [vmem:[%s5 + $0x80] sm:$0xf]
    %v1354 = vld [vmem:[%s5 + $0x84] sm:$0xf]
    %v1355 = vld [vmem:[%s5 + $0x88] sm:$0xf]
    %v1356 = vld [vmem:[%s5 + $0x8c] sm:$0xf]
    %v1357 = vld [vmem:[%s6] sm:$0x1]
    %v1359 = vlaneseq
    %v1360 = vshrl.u32 %v1359, 7
    %v1361 = vsub.s32 0, %v1360
    %v1362 = vrot.slane %v1357, %v1361
    %v1366 = vunpack.c.l.s4 1966171168
    %v1367 = vunpack.c.0.s8 %v1366
    %v1368 = vlaneseq
    %v1369 = vshrl.u32 %v1368, 7
    %v1370 = vsub.s32 %v1367, %v1369
    %v1371 = vrot.slane %v1320, %v1370
    %v1372 = vcombine.high %v1371, %v1371
    %v1374 = vunpack.c.l.s4 1966171168
    %v1375 = vunpack.c.0.s8 %v1374
    %v1376 = vlaneseq
    %v1377 = vshrl.u32 %v1376, 7
    %v1378 = vsub.s32 %v1375, %v1377
    %v1379 = vrot.slane %v1371, %v1378
    %v1381 = vunpack.c.l.s4 1966171168
    %v1382 = vunpack.c.0.s8 %v1381
    %v1383 = vlaneseq
    %v1384 = vshrl.u32 %v1383, 7
    %v1385 = vsub.s32 %v1382, %v1384
    %v1386 = vrot.slane %v1372, %v1385
    %v1387 = vcombine.high %v1379, %v1379
    %v1426 = vunpack.c.l.b16 %v1321
    %v1427 = vunpack.c.l.b16 %v1322
    %v1428 = vunpack.c.l.b16 %v1323
    %v1429 = vunpack.c.l.b16 %v1324
    %v1430 = vunpack.c.l.b16 %v1325
    %v1431 = vunpack.c.l.b16 %v1326
    %v1432 = vunpack.c.l.b16 %v1327
    %v1433 = vunpack.c.l.b16 %v1328
    %v1434 = vunpack.c.l.b16 %v1329
    %v1435 = vunpack.c.l.b16 %v1330
    %v1436 = vunpack.c.l.b16 %v1331
    %v1437 = vunpack.c.l.b16 %v1332
    %v1438 = vunpack.c.l.b16 %v1333
    %v1439 = vunpack.c.l.b16 %v1334
    %v1440 = vunpack.c.l.b16 %v1335
    %v1441 = vunpack.c.l.b16 %v1336
    %v1442 = vunpack.c.l.b16 %v1337
    %v1443 = vunpack.c.l.b16 %v1338
    %v1444 = vunpack.c.l.b16 %v1339
    %v1445 = vunpack.c.l.b16 %v1340
    %v1446 = vunpack.c.l.b16 %v1341
    %v1447 = vunpack.c.l.b16 %v1342
    %v1448 = vunpack.c.l.b16 %v1343
    %v1449 = vunpack.c.l.b16 %v1344
    %v1450 = vunpack.c.l.b16 %v1345
    %v1451 = vunpack.c.l.b16 %v1346
    %v1452 = vunpack.c.l.b16 %v1347
    %v1453 = vunpack.c.l.b16 %v1348
    %v1454 = vunpack.c.l.b16 %v1349
    %v1455 = vunpack.c.l.b16 %v1350
    %v1456 = vunpack.c.l.b16 %v1351
    %v1457 = vunpack.c.l.b16 %v1352
    %v1458 = vunpack.c.l.b16 %v1353
    %v1459 = vunpack.c.l.b16 %v1354
    %v1460 = vunpack.c.l.b16 %v1355
    %v1461 = vunpack.c.l.b16 %v1356
    %v1462 = vpack.c.b16 %v1427, %v1426
    %v1463 = vpack.c.b16 %v1429, %v1428
    %v1464 = vpack.c.b16 %v1431, %v1430
    %v1465 = vpack.c.b16 %v1433, %v1432
    %v1466 = vpack.c.b16 %v1435, %v1434
    %v1467 = vpack.c.b16 %v1437, %v1436
    %v1468 = vpack.c.b16 %v1439, %v1438
    %v1469 = vpack.c.b16 %v1441, %v1440
    %v1470 = vpack.c.b16 %v1443, %v1442
    %v1471 = vpack.c.b16 %v1445, %v1444
    %v1472 = vpack.c.b16 %v1447, %v1446
    %v1473 = vpack.c.b16 %v1449, %v1448
    %v1474 = vpack.c.b16 %v1451, %v1450
    %v1475 = vpack.c.b16 %v1453, %v1452
    %v1476 = vpack.c.b16 %v1455, %v1454
    %v1477 = vpack.c.b16 %v1457, %v1456
    %v1478 = vpack.c.b16 %v1459, %v1458
    %v1479 = vpack.c.b16 %v1461, %v1460
    %vm1498 = vcmask 261120
    %v1500 = vsel %vm1498, %v1387, 0
    %1502 = vmatprep.subr.bf16.mxu0 0
    %1503 = vmatpush1.bf16.msra.mxu0 %v1462
    %1504 = vmatprep.subr.bf16.mxu0 0
    %1505 = vmatpush1.bf16.msra.mxu0 %v1463
    %1506 = vmatprep.subr.bf16.mxu0 0
    %1507 = vmatpush1.bf16.msra.mxu0 %v1464
    %1508 = vmatprep.subr.bf16.mxu0 0
    %1509 = vmatpush1.bf16.msra.mxu0 %v1465
    %1510 = vmatprep.subr.bf16.mxu0 0
    %1511 = vmatpush1.bf16.msra.mxu0 %v1466
    %1512 = vmatprep.subr.bf16.mxu0 0
    %1513 = vmatpush1.bf16.msra.mxu0 %v1467
    %1514 = vmatprep.subr.bf16.mxu0 0
    %1515 = vmatpush1.bf16.msra.mxu0 %v1468
    %1516 = vmatprep.subr.bf16.mxu0 0
    %1517 = vmatpush1.bf16.msra.mxu0 %v1469
    %1518 = vmatprep.subr.bf16.mxu0 0
    %1519 = vmatpush1.bf16.msra.mxu0 %v1470
    %1520 = vmatprep.subr.bf16.mxu0 0
    %1521 = vmatpush1.bf16.msra.mxu0 %v1471
    %1522 = vmatprep.subr.bf16.mxu0 0
    %1523 = vmatpush1.bf16.msra.mxu0 %v1472
    %1524 = vmatprep.subr.bf16.mxu0 0
    %1525 = vmatpush1.bf16.msra.mxu0 %v1473
    %1526 = vmatprep.subr.bf16.mxu0 0
    %1527 = vmatpush1.bf16.msra.mxu0 %v1474
    %1528 = vmatprep.subr.bf16.mxu0 0
    %1529 = vmatpush1.bf16.msra.mxu0 %v1475
    %1530 = vmatprep.subr.bf16.mxu0 0
    %1531 = vmatpush1.bf16.msra.mxu0 %v1476
    %1532 = vmatprep.subr.bf16.mxu0 0
    %1533 = vmatpush1.bf16.msra.mxu0 %v1477
    %1534 = vmatprep.mubr.bf16.mxu0 %v1386
    %1535 = vmatmul.mubr.bf16.gmra.mrb[0].mxu0 %v1379
    %v1536 = vpop.f32.mrb[0].mxu0
    %v1537 = vadd.f32 %v1362, %v1536
    %v1538 = vpop.f32.mrb[0].mxu0
    %v1539 = vpop.f32.mrb[0].mxu0
    %v1540 = vpop.f32.mrb[0].mxu0
    %1541 = vdwg.mxu0
    %1542 = vmatprep.subr.bf16.mxu0 0
    %1543 = vmatpush1.bf16.msra.mxu0 %v1478
    %1544 = vmatprep.subr.bf16.mxu0 0
    %1545 = vmatpush1.bf16.msra.mxu0 %v1479
    %1546 = vmatprep.subr.bf16.mxu0 0
    %1547 = vmatpush1.bf16.msra.mxu0 0
    %1548 = vmatprep.subr.bf16.mxu0 0
    %1549 = vmatpush1.bf16.msra.mxu0 0
    %1550 = vmatprep.subr.bf16.mxu0 0
    %1551 = vmatpush1.bf16.msra.mxu0 0
    %1552 = vmatprep.subr.bf16.mxu0 0
    %1553 = vmatpush1.bf16.msra.mxu0 0
    %1554 = vmatprep.subr.bf16.mxu0 0
    %1555 = vmatpush1.bf16.msra.mxu0 0
    %1556 = vmatprep.subr.bf16.mxu0 0
    %1557 = vmatpush1.bf16.msra.mxu0 0
    %1558 = vmatprep.subr.bf16.mxu0 0
    %1559 = vmatpush1.bf16.msra.mxu0 0
    %1560 = vmatprep.subr.bf16.mxu0 0
    %1561 = vmatpush1.bf16.msra.mxu0 0
    %1562 = vmatprep.subr.bf16.mxu0 0
    %1563 = vmatpush1.bf16.msra.mxu0 0
    %1564 = vmatprep.subr.bf16.mxu0 0
    %1565 = vmatpush1.bf16.msra.mxu0 0
    %1566 = vmatprep.subr.bf16.mxu0 0
    %1567 = vmatpush1.bf16.msra.mxu0 0
    %1568 = vmatprep.subr.bf16.mxu0 0
    %1569 = vmatpush1.bf16.msra.mxu0 0
    %1570 = vmatprep.subr.bf16.mxu0 0
    %1571 = vmatpush1.bf16.msra.mxu0 0
    %1572 = vmatprep.subr.bf16.mxu0 0
    %1573 = vmatpush1.bf16.msra.mxu0 0
    %1574 = vmatprep.mubr.bf16.mxu0 0
    %1575 = vmatmul.mubr.bf16.gmra.mrb[0].mxu0 %v1500
    %v1576 = vpop.f32.mrb[0].mxu0
    %v1577 = vadd.f32 %v1537, %v1576
    %v1578 = vpop.f32.mrb[0].mxu0
    %v1579 = vpop.f32.mrb[0].mxu0
    %v1580 = vpop.f32.mrb[0].mxu0
    %1581 = vdwg.mxu0
    %v1582 = vmax.f32 %v1577, 0.0
    %v1583 = vpack.c.bf16 %v1582, %v1582
    %vm1584 = vcmask 253952
    %1585 = vst.msk [vmem:[#allocation5] sm:$0x1] %vm1584, %v1583
    %v1586 = vld [vmem:[#allocation5] sm:$0x1]
    %1587 = vst.msk [vmem:[#allocation9] sm:$0x1] %vm1584, %v1586
    %v1588 = vld [vmem:[#allocation9] sm:$0x1]
    %v1589 = vld [vmem:[%s7] sm:$0xff]
    %v1590 = vld [vmem:[%s7 + $0x8] sm:$0xff]
    %v1591 = vld [vmem:[%s7 + $0x10] sm:$0xff]
    %v1592 = vld [vmem:[%s7 + $0x18] sm:$0xff]
    %v1593 = vld [vmem:[%s8] sm:$0x3]
    %v1595 = vlaneseq
    %v1596 = vshrl.u32 %v1595, 7
    %v1597 = vsub.s32 0, %v1596
    %v1598 = vrot.slane %v1593, %v1597
    %v1599 = vlaneseq
    %v1600 = vshrl.u32 %v1599, 7
    %v1601 = vsub.s32 1, %v1600
    %v1602 = vrot.slane %v1593, %v1601
    %v1609 = vunpack.c.l.b16 %v1589
    %v1610 = vunpack.c.h.b16 %v1589
    %v1611 = vunpack.c.l.b16 %v1590
    %v1612 = vunpack.c.h.b16 %v1590
    %v1613 = vunpack.c.l.b16 %v1591
    %v1614 = vunpack.c.h.b16 %v1591
    %v1615 = vunpack.c.l.b16 %v1592
    %v1616 = vunpack.c.h.b16 %v1592
    %v1617 = vpack.c.b16 %v1611, %v1609
    %v1618 = vpack.c.b16 %v1612, %v1610
    %v1619 = vpack.c.b16 %v1615, %v1613
    %v1620 = vpack.c.b16 %v1616, %v1614
    %v1626 = vsel %vm1498, %v1588, 0
    %1628 = vmatprep.subr.bf16.mxu0 %v1618
    %1629 = vmatpush1.bf16.msra.mxu0 %v1617
    %1630 = vmatprep.subr.bf16.mxu0 %v1620
    %1631 = vmatpush1.bf16.msra.mxu0 %v1619
    %1632 = vmatprep.subr.bf16.mxu0 0
    %1633 = vmatpush1.bf16.msra.mxu0 0
    %1634 = vmatprep.subr.bf16.mxu0 0
    %1635 = vmatpush1.bf16.msra.mxu0 0
    %1636 = vmatprep.subr.bf16.mxu0 0
    %1637 = vmatpush1.bf16.msra.mxu0 0
    %1638 = vmatprep.subr.bf16.mxu0 0
    %1639 = vmatpush1.bf16.msra.mxu0 0
    %1640 = vmatprep.subr.bf16.mxu0 0
    %1641 = vmatpush1.bf16.msra.mxu0 0
    %1642 = vmatprep.subr.bf16.mxu0 0
    %1643 = vmatpush1.bf16.msra.mxu0 0
    %1644 = vmatprep.subr.bf16.mxu0 0
    %1645 = vmatpush1.bf16.msra.mxu0 0
    %1646 = vmatprep.subr.bf16.mxu0 0
    %1647 = vmatpush1.bf16.msra.mxu0 0
    %1648 = vmatprep.subr.bf16.mxu0 0
    %1649 = vmatpush1.bf16.msra.mxu0 0
    %1650 = vmatprep.subr.bf16.mxu0 0
    %1651 = vmatpush1.bf16.msra.mxu0 0
    %1652 = vmatprep.subr.bf16.mxu0 0
    %1653 = vmatpush1.bf16.msra.mxu0 0
    %1654 = vmatprep.subr.bf16.mxu0 0
    %1655 = vmatpush1.bf16.msra.mxu0 0
    %1656 = vmatprep.subr.bf16.mxu0 0
    %1657 = vmatpush1.bf16.msra.mxu0 0
    %1658 = vmatprep.subr.bf16.mxu0 0
    %1659 = vmatpush1.bf16.msra.mxu0 0
    %1660 = vmatprep.mubr.bf16.mxu0 0
    %1661 = vmatmul.mubr.bf16.gmra.mrb[0].mxu0 %v1626
    %v1662 = vpop.f32.mrb[0].mxu0
    %v1663 = vadd.f32 %v1598, %v1662
    %v1664 = vpop.f32.mrb[0].mxu0
    %v1665 = vadd.f32 %v1602, %v1664
    %v1666 = vpop.f32.mrb[0].mxu0
    %v1667 = vpop.f32.mrb[0].mxu0
    %1668 = vdwg.mxu0
    %v1669 = vmax.f32 %v1663, 0.0
    %v1670 = vmax.f32 %v1665, 0.0
    %v1671 = vpack.c.bf16 %v1669, %v1669
    %v1672 = vpack.c.bf16 %v1670, %v1670
    %v1673 = vld [vmem:[%s9] sm:$0xf]
    %v1674 = vld [vmem:[%s9 + $0x4] sm:$0xf]
    %v1675 = vld [vmem:[%s9 + $0x8] sm:$0xf]
    %v1676 = vld [vmem:[%s9 + $0xc] sm:$0xf]
    %v1677 = vld [vmem:[%s9 + $0x10] sm:$0xf]
    %v1678 = vld [vmem:[%s9 + $0x14] sm:$0xf]
    %v1679 = vld [vmem:[%s9 + $0x18] sm:$0xf]
    %v1680 = vld [vmem:[%s9 + $0x1c] sm:$0xf]
    %v1681 = vld [vmem:[%s9 + $0x20] sm:$0xf]
    %v1682 = vld [vmem:[%s9 + $0x24] sm:$0xf]
    %v1683 = vld [vmem:[%s9 + $0x28] sm:$0xf]
    %v1684 = vld [vmem:[%s9 + $0x2c] sm:$0xf]
    %v1685 = vld [vmem:[%s9 + $0x30] sm:$0xf]
    %v1686 = vld [vmem:[%s9 + $0x34] sm:$0xf]
    %v1687 = vld [vmem:[%s9 + $0x38] sm:$0xf]
    %v1688 = vld [vmem:[%s9 + $0x3c] sm:$0xf]
    %v1689 = vld [vmem:[%s9 + $0x40] sm:$0xf]
    %v1690 = vld [vmem:[%s9 + $0x44] sm:$0xf]
    %v1691 = vld [vmem:[%s9 + $0x48] sm:$0xf]
    %v1692 = vld [vmem:[%s9 + $0x4c] sm:$0xf]
    %v1693 = vld [vmem:[%s9 + $0x50] sm:$0xf]
    %v1694 = vld [vmem:[%s9 + $0x54] sm:$0xf]
    %v1695 = vld [vmem:[%s9 + $0x58] sm:$0xf]
    %v1696 = vld [vmem:[%s9 + $0x5c] sm:$0xf]
    %v1697 = vld [vmem:[%s9 + $0x60] sm:$0xf]
    %v1698 = vld [vmem:[%s9 + $0x64] sm:$0xf]
    %v1699 = vld [vmem:[%s9 + $0x68] sm:$0xf]
    %v1700 = vld [vmem:[%s9 + $0x6c] sm:$0xf]
    %v1701 = vld [vmem:[%s9 + $0x70] sm:$0xf]
    %v1702 = vld [vmem:[%s9 + $0x74] sm:$0xf]
    %v1703 = vld [vmem:[%s9 + $0x78] sm:$0xf]
    %v1704 = vld [vmem:[%s9 + $0x7c] sm:$0xf]
    %v1705 = vld [vmem:[%s10] sm:$0x1]
    %v1707 = vlaneseq
    %v1708 = vshrl.u32 %v1707, 7
    %v1709 = vsub.s32 0, %v1708
    %v1710 = vrot.slane %v1705, %v1709
    %v1744 = vunpack.c.l.b16 %v1673
    %v1745 = vunpack.c.l.b16 %v1674
    %v1746 = vunpack.c.l.b16 %v1675
    %v1747 = vunpack.c.l.b16 %v1676
    %v1748 = vunpack.c.l.b16 %v1677
    %v1749 = vunpack.c.l.b16 %v1678
    %v1750 = vunpack.c.l.b16 %v1679
    %v1751 = vunpack.c.l.b16 %v1680
    %v1752 = vunpack.c.l.b16 %v1681
    %v1753 = vunpack.c.l.b16 %v1682
    %v1754 = vunpack.c.l.b16 %v1683
    %v1755 = vunpack.c.l.b16 %v1684
    %v1756 = vunpack.c.l.b16 %v1685
    %v1757 = vunpack.c.l.b16 %v1686
    %v1758 = vunpack.c.l.b16 %v1687
    %v1759 = vunpack.c.l.b16 %v1688
    %v1760 = vunpack.c.l.b16 %v1689
    %v1761 = vunpack.c.l.b16 %v1690
    %v1762 = vunpack.c.l.b16 %v1691
    %v1763 = vunpack.c.l.b16 %v1692
    %v1764 = vunpack.c.l.b16 %v1693
    %v1765 = vunpack.c.l.b16 %v1694
    %v1766 = vunpack.c.l.b16 %v1695
    %v1767 = vunpack.c.l.b16 %v1696
    %v1768 = vunpack.c.l.b16 %v1697
    %v1769 = vunpack.c.l.b16 %v1698
    %v1770 = vunpack.c.l.b16 %v1699
    %v1771 = vunpack.c.l.b16 %v1700
    %v1772 = vunpack.c.l.b16 %v1701
    %v1773 = vunpack.c.l.b16 %v1702
    %v1774 = vunpack.c.l.b16 %v1703
    %v1775 = vunpack.c.l.b16 %v1704
    %v1776 = vpack.c.b16 %v1745, %v1744
    %v1777 = vpack.c.b16 %v1747, %v1746
    %v1778 = vpack.c.b16 %v1749, %v1748
    %v1779 = vpack.c.b16 %v1751, %v1750
    %v1780 = vpack.c.b16 %v1753, %v1752
    %v1781 = vpack.c.b16 %v1755, %v1754
    %v1782 = vpack.c.b16 %v1757, %v1756
    %v1783 = vpack.c.b16 %v1759, %v1758
    %v1784 = vpack.c.b16 %v1761, %v1760
    %v1785 = vpack.c.b16 %v1763, %v1762
    %v1786 = vpack.c.b16 %v1765, %v1764
    %v1787 = vpack.c.b16 %v1767, %v1766
    %v1788 = vpack.c.b16 %v1769, %v1768
    %v1789 = vpack.c.b16 %v1771, %v1770
    %v1790 = vpack.c.b16 %v1773, %v1772
    %v1791 = vpack.c.b16 %v1775, %v1774
    %1808 = vmatprep.subr.bf16.mxu0 0
    %1809 = vmatpush1.bf16.msra.mxu0 %v1776
    %1810 = vmatprep.subr.bf16.mxu0 0
    %1811 = vmatpush1.bf16.msra.mxu0 %v1777
    %1812 = vmatprep.subr.bf16.mxu0 0
    %1813 = vmatpush1.bf16.msra.mxu0 %v1778
    %1814 = vmatprep.subr.bf16.mxu0 0
    %1815 = vmatpush1.bf16.msra.mxu0 %v1779
    %1816 = vmatprep.subr.bf16.mxu0 0
    %1817 = vmatpush1.bf16.msra.mxu0 %v1780
    %1818 = vmatprep.subr.bf16.mxu0 0
    %1819 = vmatpush1.bf16.msra.mxu0 %v1781
    %1820 = vmatprep.subr.bf16.mxu0 0
    %1821 = vmatpush1.bf16.msra.mxu0 %v1782
    %1822 = vmatprep.subr.bf16.mxu0 0
    %1823 = vmatpush1.bf16.msra.mxu0 %v1783
    %1824 = vmatprep.subr.bf16.mxu0 0
    %1825 = vmatpush1.bf16.msra.mxu0 %v1784
    %1826 = vmatprep.subr.bf16.mxu0 0
    %1827 = vmatpush1.bf16.msra.mxu0 %v1785
    %1828 = vmatprep.subr.bf16.mxu0 0
    %1829 = vmatpush1.bf16.msra.mxu0 %v1786
    %1830 = vmatprep.subr.bf16.mxu0 0
    %1831 = vmatpush1.bf16.msra.mxu0 %v1787
    %1832 = vmatprep.subr.bf16.mxu0 0
    %1833 = vmatpush1.bf16.msra.mxu0 %v1788
    %1834 = vmatprep.subr.bf16.mxu0 0
    %1835 = vmatpush1.bf16.msra.mxu0 %v1789
    %1836 = vmatprep.subr.bf16.mxu0 0
    %1837 = vmatpush1.bf16.msra.mxu0 %v1790
    %1838 = vmatprep.subr.bf16.mxu0 0
    %1839 = vmatpush1.bf16.msra.mxu0 %v1791
    %1840 = vmatprep.mubr.bf16.mxu0 %v1672
    %1841 = vmatmul.mubr.bf16.gmra.mrb[0].mxu0 %v1671
    %v1842 = vpop.f32.mrb[0].mxu0
    %v1843 = vadd.f32 %v1710, %v1842
    %v1844 = vpop.f32.mrb[0].mxu0
    %v1845 = vpop.f32.mrb[0].mxu0
    %v1846 = vpop.f32.mrb[0].mxu0
    %1847 = vdwg.mxu0
    %vm1848 = vcmask 1041408
    %v1849 = vsel %vm1848, %v1843, -inf
    %1850 = vmax.xlane.f32.xlu0 %v1849
    %v1851 = vpop.xlane.xlu0 %1850
    %v1852 = vsub.f32 %v1843, %v1851
    %v1853 = vmul.f32 %v1852, 1.442695
    %v1854 = vpow.pop %v1853
    %v1855 = vsel %vm1848, %v1854, 0.0
    %1856 = vadd.xlane.f32.xlu0 %v1855
    %v1857 = vpop.xlane.xlu0 %1856
    %v1858 = vrcp.pop %v1857
    %v1859 = vmul.f32 %v1857, %v1858
    %v1860 = vsub.f32 2.0, %v1859
    %v1861 = vmul.f32 %v1858, %v1860
    %v1862 = vmul.f32 %v1854, %v1861
    %1863 = vst [vmem:[#allocation10] sm:$0x3] %v1862
    // Predicated region
    $region60: #{_net_forward.1} parent=1 // pred_check
      _
    $region61: #{_net_forward.1} parent=1 // pred_check_branch
      %1865 = sbr.rel (0) target = $region63
    $region62: #{_net_forward.1} parent=1 // pred_region
      %s1867 = ssub.s32 32, 32
      %1868 = vsyncadd [#allocation11], %s1867
      %s1870 = sshll.u32 [#allocation10], 4
      %s1871 = int_to_ptr.vmem [resolvable:$true] %s1870
      %1873 = dma.vmem_to_hbm [thread:$0]  %s1871, 32, %s11, [#allocation11]
    $region63: #{_net_forward.1} parent=1 // pred_fallthru
      _
    // Predicated region
    $region64: #{_net_forward.1} parent=1 // pred_check
      _
    $region65: #{_net_forward.1} parent=1 // pred_check_branch
      %1875 = sbr.rel (0) target = $region67
    $region66: #{_net_forward.1} parent=1 // pred_region
      %1876 = dma.done [#allocation11], 32
    $region67: #{_net_forward.1} parent=1 // pred_fallthru
      _
    %1877 = vsyncpa [#allocation11], 1

</llo_original>
